<compile_context>
chip_gen: v5e
topology: v5e:2x2
jax: 0.10.0
libtpu: 0.0.40
codegen_flags: <defaults>
</compile_context>

<pallas_src>
import functools

import jax
import jax.numpy as jnp
from jax.experimental import pallas as pl
from jax.experimental.pallas import tpu as pltpu


# ------------------------------- Pallas kernel ------------------------------- #

def _target_block_kernel(ids_ref, embT_ref, w1_ref, b1_ref, w2_ref, b2_ref,
                         w3_ref, b3_ref, o_ref, pool_scr, *, L, K, conv1_im2col):
    # ids_ref : (1, L) int32 (lane-dense), embT_ref: (E, dict_len)
    # wN_ref  : (K*C_in, C_out) im2col/k-major layout, bN_ref: (1, C_out)
    # o_ref   : (Lp, 3F) channels-last block, pool_scr: (L3, 3F) VMEM scratch
    dict_len = embT_ref.shape[1]

    # ---- embedding lookup: lane-dense ids -> one-hot^T -> one MXU matmul ----
    # (out-of-range ids map to a zero embedding row, like the previous version)
    ids = ids_ref[...]                                                   # (1, L)
    d_iota = jax.lax.broadcasted_iota(jnp.int32, (dict_len, L), 0)       # (dict, L)
    onehot_t = (d_iota == ids).astype(jnp.float32)                       # (dict, L)
    xT = jnp.dot(embT_ref[...], onehot_t,
                 preferred_element_type=jnp.float32)                     # (E, L)
    x = xT.T                                                             # (L, E)

    def conv_relu(x, w_ref, b_ref, im2col):
        # valid conv1d (stride 1, no pad); x: (L_in, C) channels-last
        L_in, C = x.shape
        L_out = L_in - K + 1
        if im2col:
            cols = jnp.concatenate([x[k:k + L_out, :] for k in range(K)], axis=-1)
            y = jnp.dot(cols, w_ref[...], preferred_element_type=jnp.float32)
        else:
            # K accumulated shifted matmuls (contraction already fills a 128-wide MXU)
            y = jnp.zeros((L_out, w_ref.shape[1]), jnp.float32)
            for k in range(K):
                y = y + jnp.dot(x[k:k + L_out, :], w_ref[k * C:(k + 1) * C, :],
                                preferred_element_type=jnp.float32)
        return jnp.maximum(y + b_ref[...], 0.0)                          # (L_out, O)

    x = conv_relu(x, w1_ref, b1_ref, conv1_im2col)                       # (L1, F)
    x = conv_relu(x, w2_ref, b2_ref, True)                               # (L2, 2F)
    x = conv_relu(x, w3_ref, b3_ref, True)                               # (L3, 3F)

    # maxpool1d(kernel=2, stride=2): stride-2 reads from a small VMEM scratch
    Lp = o_ref.shape[0]
    pool_scr[...] = x
    o_ref[...] = jnp.maximum(pool_scr[pl.ds(0, Lp, stride=2), :],
                             pool_scr[pl.ds(1, Lp, stride=2), :]).astype(o_ref.dtype)


# --------------------------------- wrapper ----------------------------------- #

def target_block_forward(params, target_ids):
    """params: (emb, w1, b1, w2, b2, w3, b3); conv weights in torch layout (O, C, K).
    target_ids: (B, L) int32. Returns (B, 3F, floor(L3/2)) float32 (torch NCW)."""
    emb, w1, b1, w2, b2, w3, b3 = params
    B, L = target_ids.shape
    dict_len, E = emb.shape
    O1, _, K = w1.shape
    O2, O3 = w2.shape[0], w3.shape[0]
    L3 = L - 3 * (K - 1)
    Lp = L3 // 2

    def prep_w(w):  # torch (O, C, K) -> im2col (K*C, O), k-major / c-minor row order
        O, C, Kk = w.shape
        return jnp.transpose(w, (2, 1, 0)).reshape(Kk * C, O)

    # Generation-specific knobs (conv1 path + VMEM cap).
    try:
        kind = jax.devices()[0].device_kind.lower()
    except Exception:
        kind = ""
    conv1_im2col = "v5" not in kind          # v5e/v5p: 128-wide MXU -> shifted accumulate
    if ("v5" in kind) or ("v6" in kind):
        vmem_limit = 96 * 1024 * 1024        # 128 MiB physical: allow deeper pipelining
    else:
        vmem_limit = 48 * 1024 * 1024        # v7x-safe default (64 MiB physical)

    ids3 = target_ids.reshape(B, 1, L).astype(jnp.int32)      # lane-dense ids blocks
    kernel = functools.partial(_target_block_kernel, L=L, K=K,
                               conv1_im2col=conv1_im2col)

    out_lc = pl.pallas_call(
        kernel,
        out_shape=jax.ShapeDtypeStruct((B, Lp, O3), jnp.float32),  # channels-last
        grid=(B,),
        in_specs=[
            pl.BlockSpec((None, 1, L), lambda b: (b, 0, 0)),       # ids (per-batch)
            pl.BlockSpec((E, dict_len), lambda b: (0, 0)),         # emb^T (resident)
            pl.BlockSpec((K * E, O1), lambda b: (0, 0)),
            pl.BlockSpec((1, O1), lambda b: (0, 0)),
            pl.BlockSpec((K * O1, O2), lambda b: (0, 0)),
            pl.BlockSpec((1, O2), lambda b: (0, 0)),
            pl.BlockSpec((K * O2, O3), lambda b: (0, 0)),
            pl.BlockSpec((1, O3), lambda b: (0, 0)),
        ],
        out_specs=pl.BlockSpec((None, Lp, O3), lambda b: (b, 0, 0)),
        scratch_shapes=[pltpu.VMEM((L3, O3), jnp.float32)],
        compiler_params=pltpu.CompilerParams(
            dimension_semantics=("parallel",),
            vmem_limit_bytes=vmem_limit,
        ),
    )(ids3, jnp.transpose(emb),
      prep_w(w1), b1.reshape(1, O1), prep_w(w2), b2.reshape(1, O2),
      prep_w(w3), b3.reshape(1, O3))

    # torch NCW output; in a full DeepDTA model this permute can be folded into the
    # downstream flatten/Dense instead of being materialized.
    return jnp.transpose(out_lc, (0, 2, 1))


# ---------------------------- pure-JAX reference ------------------------------ #

def target_block_ref(params, target_ids):
    emb, w1, b1, w2, b2, w3, b3 = params

    def conv_relu(x, w, b):  # x: (B, L, C) channels-last, w: torch (O, C, K)
        O, C, K = w.shape
        L_out = x.shape[1] - K + 1
        acc = jnp.zeros((x.shape[0], L_out, O), jnp.float32)
        for k in range(K):
            acc = acc + jnp.einsum("blc,oc->blo", x[:, k:k + L_out, :], w[:, :, k])
        return jnp.maximum(acc + b[None, None, :], 0.0)

    x = jnp.take(emb, target_ids, axis=0).astype(jnp.float32)   # (B, L, E)
    x = conv_relu(x, w1, b1)
    x = conv_relu(x, w2, b2)
    x = conv_relu(x, w3, b3)
    B, L3, C3 = x.shape
    Lp = L3 // 2
    pooled = jnp.max(x[:, :2 * Lp, :].reshape(B, Lp, 2, C3), axis=2)
    return jnp.transpose(pooled, (0, 2, 1))                     # (B, 3F, Lp) NCW


# ----------------------------------- main ------------------------------------- #

if __name__ == "__main__":
    B = 2
    target_dict_len = 26   # amino-acid vocabulary
    E = 128                # embedding_size
    F = 32                 # num_filters
    K = 6                  # target_kernel_size
    L = 64                 # target sequence length (small test size)

    key = jax.random.PRNGKey(0)
    k_emb, k1, kb1, k2, kb2, k3, kb3, k_ids = jax.random.split(key, 8)

    def nrm(k, shape, scale=0.1):
        return (scale * jax.random.normal(k, shape)).astype(jnp.float32)

    params = (
        nrm(k_emb, (target_dict_len, E), 1.0),           # embedding table
        nrm(k1, (F, E, K)), nrm(kb1, (F,)),              # conv1 (torch layout O, C, K)
        nrm(k2, (2 * F, F, K)), nrm(kb2, (2 * F,)),      # conv2
        nrm(k3, (3 * F, 2 * F, K)), nrm(kb3, (3 * F,)),  # conv3
    )
    target_ids = jax.random.randint(k_ids, (B, L), 0, target_dict_len, dtype=jnp.int32)

    out = jax.block_until_ready(target_block_forward(params, target_ids))
    ref = jax.block_until_ready(target_block_ref(params, target_ids))

    L3 = L - 3 * (K - 1)
    assert out.shape == (B, 3 * F, L3 // 2), out.shape
    assert jnp.allclose(out, ref, rtol=1e-4, atol=1e-4), (out, ref)

    print("KERNEL_OK")
</pallas_src>

<mosaic_0001>
module attributes {stable_mosaic.version = 11 : i64} {
  func.func @_target_block_kernel(%arg0: i32, %arg1: memref<1x1x64xi32, #tpu.memory_space<vmem>>, %arg2: memref<128x26xf32, #tpu.memory_space<vmem>>, %arg3: memref<768x32xf32, #tpu.memory_space<vmem>>, %arg4: memref<1x32xf32, #tpu.memory_space<vmem>>, %arg5: memref<192x64xf32, #tpu.memory_space<vmem>>, %arg6: memref<1x64xf32, #tpu.memory_space<vmem>>, %arg7: memref<384x96xf32, #tpu.memory_space<vmem>>, %arg8: memref<1x96xf32, #tpu.memory_space<vmem>>, %arg9: memref<1x24x96xf32, #tpu.memory_space<vmem>>, %arg10: memref<49x96xf32, #tpu.memory_space<vmem>>) attributes {dimension_semantics = [#tpu.dimension_semantics<parallel>], iteration_bounds = array<i64: 2>, scalar_prefetch = 0 : i64, scratch_operands = 1 : i64, tpu.core_type = #tpu.core_type<tc>, window_params = [{transform_indices = @transform_0, window_bounds = array<i64: 1, 1, 64>}, {pipeline_mode = #tpu.pipeline_mode<synchronous>, transform_indices = @transform_1, window_bounds = array<i64: 128, 26>}, {pipeline_mode = #tpu.pipeline_mode<synchronous>, transform_indices = @transform_2, window_bounds = array<i64: 768, 32>}, {pipeline_mode = #tpu.pipeline_mode<synchronous>, transform_indices = @transform_3, window_bounds = array<i64: 1, 32>}, {pipeline_mode = #tpu.pipeline_mode<synchronous>, transform_indices = @transform_4, window_bounds = array<i64: 192, 64>}, {pipeline_mode = #tpu.pipeline_mode<synchronous>, transform_indices = @transform_5, window_bounds = array<i64: 1, 64>}, {pipeline_mode = #tpu.pipeline_mode<synchronous>, transform_indices = @transform_6, window_bounds = array<i64: 384, 96>}, {pipeline_mode = #tpu.pipeline_mode<synchronous>, transform_indices = @transform_7, window_bounds = array<i64: 1, 96>}, {transform_indices = @transform_8, window_bounds = array<i64: 1, 24, 96>}]} {
    %c0 = arith.constant 0 : index
    %c0_0 = arith.constant 0 : index
    %c0_1 = arith.constant 0 : index
    %0 = vector.load %arg1[%c0, %c0_0, %c0_1] : memref<1x1x64xi32, #tpu.memory_space<vmem>>, vector<1x1x64xi32>
    %1 = vector.shape_cast %0 : vector<1x1x64xi32> to vector<1x64xi32>
    %2 = tpu.iota {dimensions = array<i32: 0>} : vector<26x64xi32>
    %3 = vector.broadcast %1 : vector<1x64xi32> to vector<26x64xi32>
    %4 = arith.cmpi eq, %2, %3 : vector<26x64xi32>
    %5 = arith.extui %4 : vector<26x64xi1> to vector<26x64xi32>
    %6 = arith.sitofp %5 : vector<26x64xi32> to vector<26x64xf32>
    %c0_2 = arith.constant 0 : index
    %c0_3 = arith.constant 0 : index
    %7 = vector.load %arg2[%c0_2, %c0_3] : memref<128x26xf32, #tpu.memory_space<vmem>>, vector<128x26xf32>
    %cst = arith.constant dense<0.000000e+00> : vector<128x64xf32>
    %8 = tpu.matmul %7, %6, %cst {dimension_numbers = #tpu.dot_dimension_numbers<[1], [0], [0], [1], [0, 0, 1, 1], [], []>} : vector<128x26xf32>, vector<26x64xf32>, vector<128x64xf32> -> vector<128x64xf32>
    %9 = tpu.transpose %8, [1, 0] : vector<128x64xf32> -> vector<64x128xf32>
    %10 = vector.extract_strided_slice %9 {offsets = [0, 0], sizes = [59, 128], strides = [1, 1]} : vector<64x128xf32> to vector<59x128xf32>
    %11 = vector.extract_strided_slice %9 {offsets = [1, 0], sizes = [59, 128], strides = [1, 1]} : vector<64x128xf32> to vector<59x128xf32>
    %12 = vector.extract_strided_slice %9 {offsets = [2, 0], sizes = [59, 128], strides = [1, 1]} : vector<64x128xf32> to vector<59x128xf32>
    %13 = vector.extract_strided_slice %9 {offsets = [3, 0], sizes = [59, 128], strides = [1, 1]} : vector<64x128xf32> to vector<59x128xf32>
    %14 = vector.extract_strided_slice %9 {offsets = [4, 0], sizes = [59, 128], strides = [1, 1]} : vector<64x128xf32> to vector<59x128xf32>
    %15 = vector.extract_strided_slice %9 {offsets = [5, 0], sizes = [59, 128], strides = [1, 1]} : vector<64x128xf32> to vector<59x128xf32>
    %16 = tpu.concatenate %10, %11, %12, %13, %14, %15 in 1 : vector<59x128xf32>, vector<59x128xf32>, vector<59x128xf32>, vector<59x128xf32>, vector<59x128xf32>, vector<59x128xf32> -> vector<59x768xf32>
    %c0_4 = arith.constant 0 : index
    %c0_5 = arith.constant 0 : index
    %17 = vector.load %arg3[%c0_4, %c0_5] : memref<768x32xf32, #tpu.memory_space<vmem>>, vector<768x32xf32>
    %cst_6 = arith.constant dense<0.000000e+00> : vector<59x32xf32>
    %18 = tpu.matmul %16, %17, %cst_6 {dimension_numbers = #tpu.dot_dimension_numbers<[1], [0], [0], [1], [0, 0, 1, 1], [], []>} : vector<59x768xf32>, vector<768x32xf32>, vector<59x32xf32> -> vector<59x32xf32>
    %c0_7 = arith.constant 0 : index
    %c0_8 = arith.constant 0 : index
    %19 = vector.load %arg4[%c0_7, %c0_8] : memref<1x32xf32, #tpu.memory_space<vmem>>, vector<1x32xf32>
    %20 = vector.broadcast %19 : vector<1x32xf32> to vector<59x32xf32>
    %21 = arith.addf %18, %20 : vector<59x32xf32>
    %cst_9 = arith.constant 0.000000e+00 : f32
    %22 = vector.broadcast %cst_9 : f32 to vector<59x32xf32>
    %23 = arith.maximumf %21, %22 : vector<59x32xf32>
    %24 = vector.extract_strided_slice %23 {offsets = [0, 0], sizes = [54, 32], strides = [1, 1]} : vector<59x32xf32> to vector<54x32xf32>
    %25 = vector.extract_strided_slice %23 {offsets = [1, 0], sizes = [54, 32], strides = [1, 1]} : vector<59x32xf32> to vector<54x32xf32>
    %26 = vector.extract_strided_slice %23 {offsets = [2, 0], sizes = [54, 32], strides = [1, 1]} : vector<59x32xf32> to vector<54x32xf32>
    %27 = vector.extract_strided_slice %23 {offsets = [3, 0], sizes = [54, 32], strides = [1, 1]} : vector<59x32xf32> to vector<54x32xf32>
    %28 = vector.extract_strided_slice %23 {offsets = [4, 0], sizes = [54, 32], strides = [1, 1]} : vector<59x32xf32> to vector<54x32xf32>
    %29 = vector.extract_strided_slice %23 {offsets = [5, 0], sizes = [54, 32], strides = [1, 1]} : vector<59x32xf32> to vector<54x32xf32>
    %30 = tpu.concatenate %24, %25, %26, %27, %28, %29 in 1 : vector<54x32xf32>, vector<54x32xf32>, vector<54x32xf32>, vector<54x32xf32>, vector<54x32xf32>, vector<54x32xf32> -> vector<54x192xf32>
    %c0_10 = arith.constant 0 : index
    %c0_11 = arith.constant 0 : index
    %31 = vector.load %arg5[%c0_10, %c0_11] : memref<192x64xf32, #tpu.memory_space<vmem>>, vector<192x64xf32>
    %cst_12 = arith.constant dense<0.000000e+00> : vector<54x64xf32>
    %32 = tpu.matmul %30, %31, %cst_12 {dimension_numbers = #tpu.dot_dimension_numbers<[1], [0], [0], [1], [0, 0, 1, 1], [], []>} : vector<54x192xf32>, vector<192x64xf32>, vector<54x64xf32> -> vector<54x64xf32>
    %c0_13 = arith.constant 0 : index
    %c0_14 = arith.constant 0 : index
    %33 = vector.load %arg6[%c0_13, %c0_14] : memref<1x64xf32, #tpu.memory_space<vmem>>, vector<1x64xf32>
    %34 = vector.broadcast %33 : vector<1x64xf32> to vector<54x64xf32>
    %35 = arith.addf %32, %34 : vector<54x64xf32>
    %cst_15 = arith.constant 0.000000e+00 : f32
    %36 = vector.broadcast %cst_15 : f32 to vector<54x64xf32>
    %37 = arith.maximumf %35, %36 : vector<54x64xf32>
    %38 = vector.extract_strided_slice %37 {offsets = [0, 0], sizes = [49, 64], strides = [1, 1]} : vector<54x64xf32> to vector<49x64xf32>
    %39 = vector.extract_strided_slice %37 {offsets = [1, 0], sizes = [49, 64], strides = [1, 1]} : vector<54x64xf32> to vector<49x64xf32>
    %40 = vector.extract_strided_slice %37 {offsets = [2, 0], sizes = [49, 64], strides = [1, 1]} : vector<54x64xf32> to vector<49x64xf32>
    %41 = vector.extract_strided_slice %37 {offsets = [3, 0], sizes = [49, 64], strides = [1, 1]} : vector<54x64xf32> to vector<49x64xf32>
    %42 = vector.extract_strided_slice %37 {offsets = [4, 0], sizes = [49, 64], strides = [1, 1]} : vector<54x64xf32> to vector<49x64xf32>
    %43 = vector.extract_strided_slice %37 {offsets = [5, 0], sizes = [49, 64], strides = [1, 1]} : vector<54x64xf32> to vector<49x64xf32>
    %44 = tpu.concatenate %38, %39, %40, %41, %42, %43 in 1 : vector<49x64xf32>, vector<49x64xf32>, vector<49x64xf32>, vector<49x64xf32>, vector<49x64xf32>, vector<49x64xf32> -> vector<49x384xf32>
    %c0_16 = arith.constant 0 : index
    %c0_17 = arith.constant 0 : index
    %45 = vector.load %arg7[%c0_16, %c0_17] : memref<384x96xf32, #tpu.memory_space<vmem>>, vector<384x96xf32>
    %cst_18 = arith.constant dense<0.000000e+00> : vector<49x96xf32>
    %46 = tpu.matmul %44, %45, %cst_18 {dimension_numbers = #tpu.dot_dimension_numbers<[1], [0], [0], [1], [0, 0, 1, 1], [], []>} : vector<49x384xf32>, vector<384x96xf32>, vector<49x96xf32> -> vector<49x96xf32>
    %c0_19 = arith.constant 0 : index
    %c0_20 = arith.constant 0 : index
    %47 = vector.load %arg8[%c0_19, %c0_20] : memref<1x96xf32, #tpu.memory_space<vmem>>, vector<1x96xf32>
    %48 = vector.broadcast %47 : vector<1x96xf32> to vector<49x96xf32>
    %49 = arith.addf %46, %48 : vector<49x96xf32>
    %cst_21 = arith.constant 0.000000e+00 : f32
    %50 = vector.broadcast %cst_21 : f32 to vector<49x96xf32>
    %51 = arith.maximumf %49, %50 : vector<49x96xf32>
    %c0_22 = arith.constant 0 : index
    %c0_23 = arith.constant 0 : index
    %52 = vector.load %arg10[%c0_22, %c0_23] : memref<49x96xf32, #tpu.memory_space<vmem>>, vector<49x96xf32>
    tpu.vector_store %arg10[%c0_22, %c0_23], %51 {strides = array<i32>} : memref<49x96xf32, #tpu.memory_space<vmem>>, vector<49x96xf32>,
    %c0_24 = arith.constant 0 : index
    %c0_25 = arith.constant 0 : index
    %53 = tpu.strided_load %arg10[%c0_24, %c0_25] {strides = array<i32: 2, 1>} : memref<49x96xf32, #tpu.memory_space<vmem>>, vector<24x96xf32>
    %c1 = arith.constant 1 : index
    %c0_26 = arith.constant 0 : index
    %54 = tpu.strided_load %arg10[%c1, %c0_26] {strides = array<i32: 2, 1>} : memref<49x96xf32, #tpu.memory_space<vmem>>, vector<24x96xf32>
    %55 = arith.maximumf %53, %54 : vector<24x96xf32>
    %c0_27 = arith.constant 0 : index
    %c0_28 = arith.constant 0 : index
    %c0_29 = arith.constant 0 : index
    %56 = vector.load %arg9[%c0_27, %c0_28, %c0_29] : memref<1x24x96xf32, #tpu.memory_space<vmem>>, vector<1x24x96xf32>
    %57 = vector.shape_cast %56 : vector<1x24x96xf32> to vector<24x96xf32>
    %58 = vector.shape_cast %55 : vector<24x96xf32> to vector<1x24x96xf32>
    tpu.vector_store %arg9[%c0_27, %c0_28, %c0_29], %58 {strides = array<i32>} : memref<1x24x96xf32, #tpu.memory_space<vmem>>, vector<1x24x96xf32>,
    return
  }
  func.func @transform_0(%arg0: i32) -> (i32, i32, i32) {
    %c0_i32 = arith.constant 0 : i32
    %c0_i32_0 = arith.constant 0 : i32
    %c0_i32_1 = arith.constant 0 : i32
    return %arg0, %c0_i32, %c0_i32_0 : i32, i32, i32
  }
  func.func @transform_1(%arg0: i32) -> (i32, i32) {
    %c0_i32 = arith.constant 0 : i32
    %c0_i32_0 = arith.constant 0 : i32
    %c0_i32_1 = arith.constant 0 : i32
    return %c0_i32, %c0_i32_0 : i32, i32
  }
  func.func @transform_2(%arg0: i32) -> (i32, i32) {
    %c0_i32 = arith.constant 0 : i32
    %c0_i32_0 = arith.constant 0 : i32
    %c0_i32_1 = arith.constant 0 : i32
    return %c0_i32, %c0_i32_0 : i32, i32
  }
  func.func @transform_3(%arg0: i32) -> (i32, i32) {
    %c0_i32 = arith.constant 0 : i32
    %c0_i32_0 = arith.constant 0 : i32
    %c0_i32_1 = arith.constant 0 : i32
    return %c0_i32, %c0_i32_0 : i32, i32
  }
  func.func @transform_4(%arg0: i32) -> (i32, i32) {
    %c0_i32 = arith.constant 0 : i32
    %c0_i32_0 = arith.constant 0 : i32
    %c0_i32_1 = arith.constant 0 : i32
    return %c0_i32, %c0_i32_0 : i32, i32
  }
  func.func @transform_5(%arg0: i32) -> (i32, i32) {
    %c0_i32 = arith.constant 0 : i32
    %c0_i32_0 = arith.constant 0 : i32
    %c0_i32_1 = arith.constant 0 : i32
    return %c0_i32, %c0_i32_0 : i32, i32
  }
  func.func @transform_6(%arg0: i32) -> (i32, i32) {
    %c0_i32 = arith.constant 0 : i32
    %c0_i32_0 = arith.constant 0 : i32
    %c0_i32_1 = arith.constant 0 : i32
    return %c0_i32, %c0_i32_0 : i32, i32
  }
  func.func @transform_7(%arg0: i32) -> (i32, i32) {
    %c0_i32 = arith.constant 0 : i32
    %c0_i32_0 = arith.constant 0 : i32
    %c0_i32_1 = arith.constant 0 : i32
    return %c0_i32, %c0_i32_0 : i32, i32
  }
  func.func @transform_8(%arg0: i32) -> (i32, i32, i32) {
    %c0_i32 = arith.constant 0 : i32
    %c0_i32_0 = arith.constant 0 : i32
    %c0_i32_1 = arith.constant 0 : i32
    return %arg0, %c0_i32, %c0_i32_0 : i32, i32, i32
  }
}

</mosaic_0001>

<llo_original>
// kernel: tpu_custom_call.1
$region0: #{tpu_custom_call.1}
  #allocation0 [shape = 'u32[]', space=smem, size = 0x4, offset = 0x4, fixed_abs, tag = 'smem constant byte address 0x4 - core index']
  #allocation1 [shape = 'u32[72,128]{1,0:T(1,128)}', space=vmem, size = 0x9000, scoped, tag = 'internal scratch']
  #allocation2 [shape = 'f32[49,96]{1,0:T(8,128)}', space=vmem, size = 0x7000, scoped, tag = 'scratch operand']
  %s0 = inlined_call_operand.vmem [shape: s32[2,1,64], index: 0, kind: input, shape index: {}]
  %s1 = inlined_call_operand.vmem [shape: f32[128,26], index: 1, kind: input, shape index: {}]
  %s2 = inlined_call_operand.vmem [shape: f32[768,32], index: 2, kind: input, shape index: {}]
  %s3 = inlined_call_operand.vmem [shape: f32[1,32], index: 3, kind: input, shape index: {}]
  %s4 = inlined_call_operand.vmem [shape: f32[192,64], index: 4, kind: input, shape index: {}]
  %s5 = inlined_call_operand.vmem [shape: f32[1,64], index: 5, kind: input, shape index: {}]
  %s6 = inlined_call_operand.vmem [shape: f32[384,96], index: 6, kind: input, shape index: {}]
  %s7 = inlined_call_operand.vmem [shape: f32[1,96], index: 7, kind: input, shape index: {}]
  %s8 = inlined_call_operand.hbm [shape: f32[2,24,96], index: 8, kind: output, shape index: {}]
  %s9 = sld [smem:[#allocation0]]
  $region65: #{tpu_custom_call.1} parent=0
    _
  %s11 = ssub.s32 1, %s9
  %s12 = scalar_select 0, %s11, %s9
  $region1: #{tpu_custom_call.1} parent=0
    #allocation3 [shape = 'u8[24576]{0}', space=vmem, size = 0x6000, scoped, tag = 'output window, operand 0']
    #allocation4 [shape = 's32[2]{0}', space=sflag, size = 0x8, scoped, tag = 'scoped memory for tpu_custom_call.1']
    %13 = vsyncpa [#allocation4], 0
    %s14 = scalar_lea.sflag [#allocation4], 1
    %15 = vsyncpa %s14, 0
    loop: start=0, step=1, limit=4
    $region2: #{tpu_custom_call.1} parent=1 // loop_pre_header
      _
    $region3: #{tpu_custom_call.1} parent=1 // loop_header
      %s17 = sphi 0, %s21
      %p18 = scmp.ge.s32.totalorder %s17, 4
      %s27 = sphi 0, %s29
      %s30 = sphi 0, %s27
      %s31 = sphi 0, %s30
      %s47 = sphi 0, %s31
      %s51 = sphi 0, %s51
      %s53 = sphi 0, %s51
      %s54 = sphi 0, %s53
      %s68 = sphi 0, %s54
      %s72 = sphi 0, %s72
      %s74 = sphi 0, %s72
      %s75 = sphi 0, %s74
      %s89 = sphi 0, %s75
      %s93 = sphi 0, %s93
      %s95 = sphi 0, %s93
      %s96 = sphi 0, %s95
      %s110 = sphi 0, %s96
      %s114 = sphi 0, %s114
      %s116 = sphi 0, %s114
      %s117 = sphi 0, %s116
      %s131 = sphi 0, %s117
      %s135 = sphi 0, %s135
      %s137 = sphi 0, %s135
      %s138 = sphi 0, %s137
      %s152 = sphi 0, %s138
      %s156 = sphi 0, %s156
      %s158 = sphi 0, %s156
      %s159 = sphi 0, %s158
      %s173 = sphi 0, %s159
      %s177 = sphi 0, %s177
      %s179 = sphi 0, %s177
      %s180 = sphi 0, %s179
      %s194 = sphi 0, %s180
      %s200 = sphi 0, %s202
      %s203 = sphi 0, %s200
      %s204 = sphi 0, %s203
      %s220 = sphi 0, %s204
    $region4: #{tpu_custom_call.1} parent=1 // loop_header_branch
      %20 = sbr.rel (%p18) target = $region8
    $region5: #{tpu_custom_call.1} parent=1 // loop_body
      %s22 = ssub.s32 %s17, 1
      %s23 = ssub.s32 %s17, 2
      %s24 = sadd.s32 %s17, 1
      %s25 = ssub.s32 %s17, %s24
      %p26 = scmp.eq.s32.totalorder %s25, 0
      %s28 = sadd.s32 %s27, 1
      %s29 = scalar_select %p26, %s27, %s28
      %p32 = pneg %p26
      %p33 = scmp.eq.s32.totalorder %s17, 1
      %p34 = por %p32, %p33
      %p35 = scmp.ne.s32.totalorder %s27, %s30
      %p36 = scmp.eq.s32.totalorder %s17, 0
      %p37 = por %p35, %p36
      %p38 = scmp.ne.s32.totalorder %s27, %s30
      %p39 = scmp.eq.s32.totalorder %s22, 1
      %p40 = por %p38, %p39
      %p41 = scmp.ne.s32.totalorder %s30, %s31
      %p42 = scmp.eq.s32.totalorder %s22, 0
      %p43 = por %p41, %p42
      %p44 = scmp.ne.s32.totalorder %s30, %s31
      %p45 = scmp.eq.s32.totalorder %s23, 1
      %p46 = por %p44, %p45
      %p48 = scmp.ne.s32.totalorder %s31, %s47
      %p49 = scmp.eq.s32.totalorder %s23, 0
      %p50 = por %p48, %p49
      %s52 = sadd.s32 %s51, 1
      %p55 = scmp.eq.s32.totalorder %s17, 1
      %p56 = scmp.ne.s32.totalorder %s51, %s53
      %p57 = scmp.eq.s32.totalorder %s17, 0
      %p58 = por %p56, %p57
      %p59 = scmp.ne.s32.totalorder %s51, %s53
      %p60 = scmp.eq.s32.totalorder %s22, 1
      %p61 = por %p59, %p60
      %p62 = scmp.ne.s32.totalorder %s53, %s54
      %p63 = scmp.eq.s32.totalorder %s22, 0
      %p64 = por %p62, %p63
      %p65 = scmp.ne.s32.totalorder %s53, %s54
      %p66 = scmp.eq.s32.totalorder %s23, 1
      %p67 = por %p65, %p66
      %p69 = scmp.ne.s32.totalorder %s54, %s68
      %p70 = scmp.eq.s32.totalorder %s23, 0
      %p71 = por %p69, %p70
      %s73 = sadd.s32 %s72, 1
      %p76 = scmp.eq.s32.totalorder %s17, 1
      %p77 = scmp.ne.s32.totalorder %s72, %s74
      %p78 = scmp.eq.s32.totalorder %s17, 0
      %p79 = por %p77, %p78
      %p80 = scmp.ne.s32.totalorder %s72, %s74
      %p81 = scmp.eq.s32.totalorder %s22, 1
      %p82 = por %p80, %p81
      %p83 = scmp.ne.s32.totalorder %s74, %s75
      %p84 = scmp.eq.s32.totalorder %s22, 0
      %p85 = por %p83, %p84
      %p86 = scmp.ne.s32.totalorder %s74, %s75
      %p87 = scmp.eq.s32.totalorder %s23, 1
      %p88 = por %p86, %p87
      %p90 = scmp.ne.s32.totalorder %s75, %s89
      %p91 = scmp.eq.s32.totalorder %s23, 0
      %p92 = por %p90, %p91
      %s94 = sadd.s32 %s93, 1
      %p97 = scmp.eq.s32.totalorder %s17, 1
      %p98 = scmp.ne.s32.totalorder %s93, %s95
      %p99 = scmp.eq.s32.totalorder %s17, 0
      %p100 = por %p98, %p99
      %p101 = scmp.ne.s32.totalorder %s93, %s95
      %p102 = scmp.eq.s32.totalorder %s22, 1
      %p103 = por %p101, %p102
      %p104 = scmp.ne.s32.totalorder %s95, %s96
      %p105 = scmp.eq.s32.totalorder %s22, 0
      %p106 = por %p104, %p105
      %p107 = scmp.ne.s32.totalorder %s95, %s96
      %p108 = scmp.eq.s32.totalorder %s23, 1
      %p109 = por %p107, %p108
      %p111 = scmp.ne.s32.totalorder %s96, %s110
      %p112 = scmp.eq.s32.totalorder %s23, 0
      %p113 = por %p111, %p112
      %s115 = sadd.s32 %s114, 1
      %p118 = scmp.eq.s32.totalorder %s17, 1
      %p119 = scmp.ne.s32.totalorder %s114, %s116
      %p120 = scmp.eq.s32.totalorder %s17, 0
      %p121 = por %p119, %p120
      %p122 = scmp.ne.s32.totalorder %s114, %s116
      %p123 = scmp.eq.s32.totalorder %s22, 1
      %p124 = por %p122, %p123
      %p125 = scmp.ne.s32.totalorder %s116, %s117
      %p126 = scmp.eq.s32.totalorder %s22, 0
      %p127 = por %p125, %p126
      %p128 = scmp.ne.s32.totalorder %s116, %s117
      %p129 = scmp.eq.s32.totalorder %s23, 1
      %p130 = por %p128, %p129
      %p132 = scmp.ne.s32.totalorder %s117, %s131
      %p133 = scmp.eq.s32.totalorder %s23, 0
      %p134 = por %p132, %p133
      %s136 = sadd.s32 %s135, 1
      %p139 = scmp.eq.s32.totalorder %s17, 1
      %p140 = scmp.ne.s32.totalorder %s135, %s137
      %p141 = scmp.eq.s32.totalorder %s17, 0
      %p142 = por %p140, %p141
      %p143 = scmp.ne.s32.totalorder %s135, %s137
      %p144 = scmp.eq.s32.totalorder %s22, 1
      %p145 = por %p143, %p144
      %p146 = scmp.ne.s32.totalorder %s137, %s138
      %p147 = scmp.eq.s32.totalorder %s22, 0
      %p148 = por %p146, %p147
      %p149 = scmp.ne.s32.totalorder %s137, %s138
      %p150 = scmp.eq.s32.totalorder %s23, 1
      %p151 = por %p149, %p150
      %p153 = scmp.ne.s32.totalorder %s138, %s152
      %p154 = scmp.eq.s32.totalorder %s23, 0
      %p155 = por %p153, %p154
      %s157 = sadd.s32 %s156, 1
      %p160 = scmp.eq.s32.totalorder %s17, 1
      %p161 = scmp.ne.s32.totalorder %s156, %s158
      %p162 = scmp.eq.s32.totalorder %s17, 0
      %p163 = por %p161, %p162
      %p164 = scmp.ne.s32.totalorder %s156, %s158
      %p165 = scmp.eq.s32.totalorder %s22, 1
      %p166 = por %p164, %p165
      %p167 = scmp.ne.s32.totalorder %s158, %s159
      %p168 = scmp.eq.s32.totalorder %s22, 0
      %p169 = por %p167, %p168
      %p170 = scmp.ne.s32.totalorder %s158, %s159
      %p171 = scmp.eq.s32.totalorder %s23, 1
      %p172 = por %p170, %p171
      %p174 = scmp.ne.s32.totalorder %s159, %s173
      %p175 = scmp.eq.s32.totalorder %s23, 0
      %p176 = por %p174, %p175
      %s178 = sadd.s32 %s177, 1
      %p181 = scmp.eq.s32.totalorder %s17, 1
      %p182 = scmp.ne.s32.totalorder %s177, %s179
      %p183 = scmp.eq.s32.totalorder %s17, 0
      %p184 = por %p182, %p183
      %p185 = scmp.ne.s32.totalorder %s177, %s179
      %p186 = scmp.eq.s32.totalorder %s22, 1
      %p187 = por %p185, %p186
      %p188 = scmp.ne.s32.totalorder %s179, %s180
      %p189 = scmp.eq.s32.totalorder %s22, 0
      %p190 = por %p188, %p189
      %p191 = scmp.ne.s32.totalorder %s179, %s180
      %p192 = scmp.eq.s32.totalorder %s23, 1
      %p193 = por %p191, %p192
      %p195 = scmp.ne.s32.totalorder %s180, %s194
      %p196 = scmp.eq.s32.totalorder %s23, 0
      %p197 = por %p195, %p196
      %s198 = ssub.s32 %s17, %s24
      %p199 = scmp.eq.s32.totalorder %s198, 0
      %s201 = sadd.s32 %s200, 1
      %s202 = scalar_select %p199, %s200, %s201
      %p205 = pneg %p199
      %p206 = scmp.eq.s32.totalorder %s17, 1
      %p207 = por %p205, %p206
      %p208 = scmp.ne.s32.totalorder %s200, %s203
      %p209 = scmp.eq.s32.totalorder %s17, 0
      %p210 = por %p208, %p209
      %p211 = scmp.ne.s32.totalorder %s200, %s203
      %p212 = scmp.eq.s32.totalorder %s22, 1
      %p213 = por %p211, %p212
      %p214 = scmp.ne.s32.totalorder %s203, %s204
      %p215 = scmp.eq.s32.totalorder %s22, 0
      %p216 = por %p214, %p215
      %p217 = scmp.ne.s32.totalorder %s203, %s204
      %p218 = scmp.eq.s32.totalorder %s23, 1
      %p219 = por %p217, %p218
      %p221 = scmp.ne.s32.totalorder %s204, %s220
      %p222 = scmp.eq.s32.totalorder %s23, 0
      %p223 = por %p221, %p222
      %p224 = scmp.le.s32.totalorder 1, %s17
      %p225 = scmp.lt.s32.totalorder %s17, 3
      %p226 = pnand %p224, %p225
      %p227 = pneg %p226
      // Predicated region
      $region9: #{tpu_custom_call.1} parent=5 // pred_check
        _
      $region10: #{tpu_custom_call.1} parent=5 // pred_check_branch
        %229 = sbr.rel (%p226) target = $region12
      $region11: #{tpu_custom_call.1} parent=5 // pred_region
        %s230 = ssub.s32 %s17, 1
        // Predicated region
        $region13: #{tpu_custom_call.1} parent=11 // pred_check
          %p231 = pneg %p64
        $region14: #{tpu_custom_call.1} parent=11 // pred_check_branch
          %233 = sbr.rel (%p231) target = $region16
        $region15: #{tpu_custom_call.1} parent=11 // pred_region
          _
        $region16: #{tpu_custom_call.1} parent=11 // pred_fallthru
          _
        // Predicated region
        $region17: #{tpu_custom_call.1} parent=11 // pred_check
          %p234 = pneg %p85
        $region18: #{tpu_custom_call.1} parent=11 // pred_check_branch
          %236 = sbr.rel (%p234) target = $region20
        $region19: #{tpu_custom_call.1} parent=11 // pred_region
          _
        $region20: #{tpu_custom_call.1} parent=11 // pred_fallthru
          _
        // Predicated region
        $region21: #{tpu_custom_call.1} parent=11 // pred_check
          %p237 = pneg %p106
        $region22: #{tpu_custom_call.1} parent=11 // pred_check_branch
          %239 = sbr.rel (%p237) target = $region24
        $region23: #{tpu_custom_call.1} parent=11 // pred_region
          _
        $region24: #{tpu_custom_call.1} parent=11 // pred_fallthru
          _
        // Predicated region
        $region25: #{tpu_custom_call.1} parent=11 // pred_check
          %p240 = pneg %p127
        $region26: #{tpu_custom_call.1} parent=11 // pred_check_branch
          %242 = sbr.rel (%p240) target = $region28
        $region27: #{tpu_custom_call.1} parent=11 // pred_region
          _
        $region28: #{tpu_custom_call.1} parent=11 // pred_fallthru
          _
        // Predicated region
        $region29: #{tpu_custom_call.1} parent=11 // pred_check
          %p243 = pneg %p148
        $region30: #{tpu_custom_call.1} parent=11 // pred_check_branch
          %245 = sbr.rel (%p243) target = $region32
        $region31: #{tpu_custom_call.1} parent=11 // pred_region
          _
        $region32: #{tpu_custom_call.1} parent=11 // pred_fallthru
          _
        // Predicated region
        $region33: #{tpu_custom_call.1} parent=11 // pred_check
          %p246 = pneg %p169
        $region34: #{tpu_custom_call.1} parent=11 // pred_check_branch
          %248 = sbr.rel (%p246) target = $region36
        $region35: #{tpu_custom_call.1} parent=11 // pred_region
          _
        $region36: #{tpu_custom_call.1} parent=11 // pred_fallthru
          _
        // Predicated region
        $region37: #{tpu_custom_call.1} parent=11 // pred_check
          %p249 = pneg %p190
        $region38: #{tpu_custom_call.1} parent=11 // pred_check_branch
          %251 = sbr.rel (%p249) target = $region40
        $region39: #{tpu_custom_call.1} parent=11 // pred_region
          _
        $region40: #{tpu_custom_call.1} parent=11 // pred_fallthru
          _
      $region12: #{tpu_custom_call.1} parent=5 // pred_fallthru
        _
      %p252 = scmp.lt.s32.totalorder %s17, 2
      // Predicated region
      $region41: #{tpu_custom_call.1} parent=5 // pred_check
        %p253 = pneg %p252
      $region42: #{tpu_custom_call.1} parent=5 // pred_check_branch
        %255 = sbr.rel (%p253) target = $region44
      $region43: #{tpu_custom_call.1} parent=5 // pred_region
        // Predicated region
        $region45: #{tpu_custom_call.1} parent=43 // pred_check
          %p256 = pneg %p37
        $region46: #{tpu_custom_call.1} parent=43 // pred_check_branch
          %258 = sbr.rel (%p256) target = $region48
        $region47: #{tpu_custom_call.1} parent=43 // pred_region
          %p259 = scmp.lt.s32.totalorder %s17, 1
          %s260 = scalar_select %p259, %s17, 1
          %s261 = scalar_lea.vmem %s0, %s260
        $region48: #{tpu_custom_call.1} parent=43 // pred_fallthru
          _
      $region44: #{tpu_custom_call.1} parent=5 // pred_fallthru
        _
      %p262 = scmp.le.s32.totalorder 1, %s17
      %p263 = scmp.lt.s32.totalorder %s17, 3
      %p264 = pnand %p262, %p263
      %p265 = pneg %p264
      // Predicated region
      $region49: #{tpu_custom_call.1} parent=5 // pred_check
        _
      $region50: #{tpu_custom_call.1} parent=5 // pred_check_branch
        %267 = sbr.rel (%p264) target = $region52
      $region51: #{tpu_custom_call.1} parent=5 // pred_region
        %s268 = ssub.s32 %s17, 1
        %p269 = scmp.lt.s32.totalorder %s22, 1
        %s270 = scalar_select %p269, %s22, 1
        %s271 = scalar_lea.vmem %s0, %s270
        %p272 = pneg %p43
        %p273 = pneg %p40
        %p274 = pneg %p64
        %p275 = pneg %p61
        %p276 = pneg %p85
        %p277 = pneg %p82
        %p278 = pneg %p106
        %p279 = pneg %p103
        %p280 = pneg %p127
        %p281 = pneg %p124
        %p282 = pneg %p148
        %p283 = pneg %p145
        %p284 = pneg %p169
        %p285 = pneg %p166
        %p286 = pneg %p190
        %p287 = pneg %p187
        %p288 = pneg %p216
        %p289 = pneg %p213
        %s290 = sand.u32 %s203, 1
        %s291 = scalar_lea.sflag [#allocation4], %s290
        %s292 = sand.u32 %s203, 1
        %s293 = smul.addr %s292, 24
        %s294 = scalar_lea.vmem [#allocation3], %s293
        %p295 = scmp.lt.s32.totalorder %s22, 1
        %s296 = scalar_select %p295, %s22, 1
        %s297 = scalar_lea.vmem %s0, %s296
        %v298 = vld [vmem:[%s297] sm:$0x1]
        %v299 = vlaneseq
        %v300 = vshrl.u32 %v299, 7
        %v301 = vadd.s32 %v300, 8
        %v302 = vadd.s32 %v300, 16
        %v303 = vadd.s32 %v300, 24
        %v304 = vperm.slane %v298, 0
        %vm305 = vcmp.eq.s32.totalorder %v300, %v304
        %vm306 = vcmp.eq.s32.totalorder %v301, %v304
        %vm307 = vcmp.eq.s32.totalorder %v302, %v304
        %vm308 = vcmp.eq.s32.totalorder %v303, %v304
        %v309 = vsel %vm305, 1, 0
        %v310 = vsel %vm306, 1, 0
        %v311 = vsel %vm307, 1, 0
        %v312 = vsel %vm308, 1, 0
        %v313 = vcvt.s32.f32 %v309
        %v314 = vcvt.s32.f32 %v310
        %v315 = vcvt.s32.f32 %v311
        %v316 = vcvt.s32.f32 %v312
        %v317 = vld [vmem:[%s1] sm:$0xff]
        %v318 = vld [vmem:[%s1 + $0x8] sm:$0xff]
        %v319 = vld [vmem:[%s1 + $0x10] sm:$0xff]
        %v320 = vld [vmem:[%s1 + $0x18] sm:$0xff]
        %v321 = vld [vmem:[%s1 + $0x20] sm:$0xff]
        %v322 = vld [vmem:[%s1 + $0x28] sm:$0xff]
        %v323 = vld [vmem:[%s1 + $0x30] sm:$0xff]
        %v324 = vld [vmem:[%s1 + $0x38] sm:$0xff]
        %v325 = vld [vmem:[%s1 + $0x40] sm:$0xff]
        %v326 = vld [vmem:[%s1 + $0x48] sm:$0xff]
        %v327 = vld [vmem:[%s1 + $0x50] sm:$0xff]
        %v328 = vld [vmem:[%s1 + $0x58] sm:$0xff]
        %v329 = vld [vmem:[%s1 + $0x60] sm:$0xff]
        %v330 = vld [vmem:[%s1 + $0x68] sm:$0xff]
        %v331 = vld [vmem:[%s1 + $0x70] sm:$0xff]
        %v332 = vld [vmem:[%s1 + $0x78] sm:$0xff]
        %vm333 = vcmask 211968
        %v335 = vsel %vm333, %v317, 0
        %v338 = vsel %vm333, %v318, 0
        %v341 = vsel %vm333, %v319, 0
        %v344 = vsel %vm333, %v320, 0
        %v347 = vsel %vm333, %v321, 0
        %v350 = vsel %vm333, %v322, 0
        %v353 = vsel %vm333, %v323, 0
        %v356 = vsel %vm333, %v324, 0
        %v359 = vsel %vm333, %v325, 0
        %v362 = vsel %vm333, %v326, 0
        %v365 = vsel %vm333, %v327, 0
        %v368 = vsel %vm333, %v328, 0
        %v371 = vsel %vm333, %v329, 0
        %v374 = vsel %vm333, %v330, 0
        %v377 = vsel %vm333, %v331, 0
        %v380 = vsel %vm333, %v332, 0
        %vm382 = vcmask 1041408
        %v384 = vsel %vm382, %v316, 0
        %386 = vmatpush.msra.mxu0 0.0
        %387 = vmatpush.msra.mxu0 0.0
        %388 = vmatpush.msra.mxu0 0.0
        %389 = vmatpush.msra.mxu0 0.0
        %390 = vmatpush.msra.mxu0 0.0
        %391 = vmatpush.msra.mxu0 0.0
        %392 = vmatpush.msra.mxu0 0.0
        %393 = vmatpush.msra.mxu0 0.0
        %394 = vmatpush.msra.mxu0 0.0
        %395 = vmatpush.msra.mxu0 0.0
        %396 = vmatpush.msra.mxu0 0.0
        %397 = vmatpush.msra.mxu0 0.0
        %398 = vmatpush.msra.mxu0 %v384
        %399 = vmatpush.msra.mxu0 %v315
        %400 = vmatpush.msra.mxu0 %v314
        %401 = vmatpush.msra.mxu0 %v313
        %402 = vmatmul.f32.gmra.mxu0 %v335
        %v403 = vpop.f32.mrf.mxu0
        %v404 = vadd.f32 0.0, %v403
        %405 = vmatmul.f32.gmra.mxu0 %v338
        %v406 = vpop.f32.mrf.mxu0
        %v407 = vadd.f32 0.0, %v406
        %408 = vmatmul.f32.gmra.mxu0 %v341
        %v409 = vpop.f32.mrf.mxu0
        %v410 = vadd.f32 0.0, %v409
        %411 = vmatmul.f32.gmra.mxu0 %v344
        %v412 = vpop.f32.mrf.mxu0
        %v413 = vadd.f32 0.0, %v412
        %414 = vmatmul.f32.gmra.mxu0 %v347
        %v415 = vpop.f32.mrf.mxu0
        %v416 = vadd.f32 0.0, %v415
        %417 = vmatmul.f32.gmra.mxu0 %v350
        %v418 = vpop.f32.mrf.mxu0
        %v419 = vadd.f32 0.0, %v418
        %420 = vmatmul.f32.gmra.mxu0 %v353
        %v421 = vpop.f32.mrf.mxu0
        %v422 = vadd.f32 0.0, %v421
        %423 = vmatmul.f32.gmra.mxu0 %v356
        %v424 = vpop.f32.mrf.mxu0
        %v425 = vadd.f32 0.0, %v424
        %426 = vmatmul.f32.gmra.mxu0 %v359
        %v427 = vpop.f32.mrf.mxu0
        %v428 = vadd.f32 0.0, %v427
        %429 = vmatmul.f32.gmra.mxu0 %v362
        %v430 = vpop.f32.mrf.mxu0
        %v431 = vadd.f32 0.0, %v430
        %432 = vmatmul.f32.gmra.mxu0 %v365
        %v433 = vpop.f32.mrf.mxu0
        %v434 = vadd.f32 0.0, %v433
        %435 = vmatmul.f32.gmra.mxu0 %v368
        %v436 = vpop.f32.mrf.mxu0
        %v437 = vadd.f32 0.0, %v436
        %438 = vmatmul.f32.gmra.mxu0 %v371
        %v439 = vpop.f32.mrf.mxu0
        %v440 = vadd.f32 0.0, %v439
        %441 = vmatmul.f32.gmra.mxu0 %v374
        %v442 = vpop.f32.mrf.mxu0
        %v443 = vadd.f32 0.0, %v442
        %444 = vmatmul.f32.gmra.mxu0 %v377
        %v445 = vpop.f32.mrf.mxu0
        %v446 = vadd.f32 0.0, %v445
        %447 = vmatmul.f32.gmra.mxu0 %v380
        %v448 = vpop.f32.mrf.mxu0
        %v449 = vadd.f32 0.0, %v448
        %450 = vdwg.mxu0
        %451 = vxpose.xlu0.b32.start [1/16] %v404, 128
        %452 = vxpose.xlu0.b32.cont [2/16] %v407, 128
        %453 = vxpose.xlu0.b32.cont [3/16] %v410, 128
        %454 = vxpose.xlu0.b32.cont [4/16] %v413, 128
        %455 = vxpose.xlu0.b32.cont [5/16] %v416, 128
        %456 = vxpose.xlu0.b32.cont [6/16] %v419, 128
        %457 = vxpose.xlu0.b32.cont [7/16] %v422, 128
        %458 = vxpose.xlu0.b32.cont [8/16] %v425, 128
        %459 = vxpose.xlu0.b32.cont [9/16] %v428, 128
        %460 = vxpose.xlu0.b32.cont [10/16] %v431, 128
        %461 = vxpose.xlu0.b32.cont [11/16] %v434, 128
        %462 = vxpose.xlu0.b32.cont [12/16] %v437, 128
        %463 = vxpose.xlu0.b32.cont [13/16] %v440, 128
        %464 = vxpose.xlu0.b32.cont [14/16] %v443, 128
        %465 = vxpose.xlu0.b32.cont [15/16] %v446, 128
        %466 = vxpose.xlu0.b32.end [16/16] %v449, 128
        %v467 = vpop.trf.xlu0
        %v468 = vpop.trf.xlu0
        %v469 = vpop.trf.xlu0
        %v470 = vpop.trf.xlu0
        %v471 = vpop.trf.xlu0
        %v472 = vpop.trf.xlu0
        %v473 = vpop.trf.xlu0
        %v474 = vpop.trf.xlu0
        %v475 = vpop.trf.xlu0
        %v476 = vpop.trf.xlu0
        %v477 = vpop.trf.xlu0
        %v478 = vpop.trf.xlu0
        %v479 = vpop.trf.xlu0
        %v480 = vpop.trf.xlu0
        %v481 = vpop.trf.xlu0
        %v482 = vpop.trf.xlu0
        %vm491 = vcmask 1046528
        %v492 = vrot.slane %v467, 1
        %v493 = vrot.slane %v468, 1
        %v494 = vsel %vm491, %v492, %v493
        %v495 = vrot.slane %v469, 1
        %v496 = vsel %vm491, %v493, %v495
        %v497 = vrot.slane %v470, 1
        %v498 = vsel %vm491, %v495, %v497
        %v499 = vrot.slane %v471, 1
        %v500 = vsel %vm491, %v497, %v499
        %v501 = vrot.slane %v472, 1
        %v502 = vsel %vm491, %v499, %v501
        %v503 = vrot.slane %v473, 1
        %v504 = vsel %vm491, %v501, %v503
        %v505 = vrot.slane %v474, 1
        %v506 = vsel %vm491, %v503, %v505
        %vm515 = vcmask 1045504
        %v516 = vrot.slane %v467, 2
        %v517 = vrot.slane %v468, 2
        %v518 = vsel %vm515, %v516, %v517
        %v519 = vrot.slane %v469, 2
        %v520 = vsel %vm515, %v517, %v519
        %v521 = vrot.slane %v470, 2
        %v522 = vsel %vm515, %v519, %v521
        %v523 = vrot.slane %v471, 2
        %v524 = vsel %vm515, %v521, %v523
        %v525 = vrot.slane %v472, 2
        %v526 = vsel %vm515, %v523, %v525
        %v527 = vrot.slane %v473, 2
        %v528 = vsel %vm515, %v525, %v527
        %v529 = vrot.slane %v474, 2
        %v530 = vsel %vm515, %v527, %v529
        %vm539 = vcmask 1044480
        %v540 = vrot.slane %v467, 3
        %v541 = vrot.slane %v468, 3
        %v542 = vsel %vm539, %v540, %v541
        %v543 = vrot.slane %v469, 3
        %v544 = vsel %vm539, %v541, %v543
        %v545 = vrot.slane %v470, 3
        %v546 = vsel %vm539, %v543, %v545
        %v547 = vrot.slane %v471, 3
        %v548 = vsel %vm539, %v545, %v547
        %v549 = vrot.slane %v472, 3
        %v550 = vsel %vm539, %v547, %v549
        %v551 = vrot.slane %v473, 3
        %v552 = vsel %vm539, %v549, %v551
        %v553 = vrot.slane %v474, 3
        %v554 = vsel %vm539, %v551, %v553
        %vm563 = vcmask 1043456
        %v564 = vrot.slane %v467, 4
        %v565 = vrot.slane %v468, 4
        %v566 = vsel %vm563, %v564, %v565
        %v567 = vrot.slane %v469, 4
        %v568 = vsel %vm563, %v565, %v567
        %v569 = vrot.slane %v470, 4
        %v570 = vsel %vm563, %v567, %v569
        %v571 = vrot.slane %v471, 4
        %v572 = vsel %vm563, %v569, %v571
        %v573 = vrot.slane %v472, 4
        %v574 = vsel %vm563, %v571, %v573
        %v575 = vrot.slane %v473, 4
        %v576 = vsel %vm563, %v573, %v575
        %v577 = vrot.slane %v474, 4
        %v578 = vsel %vm563, %v575, %v577
        %vm587 = vcmask 1042432
        %v588 = vrot.slane %v467, 5
        %v589 = vrot.slane %v468, 5
        %v590 = vsel %vm587, %v588, %v589
        %v591 = vrot.slane %v469, 5
        %v592 = vsel %vm587, %v589, %v591
        %v593 = vrot.slane %v470, 5
        %v594 = vsel %vm587, %v591, %v593
        %v595 = vrot.slane %v471, 5
        %v596 = vsel %vm587, %v593, %v595
        %v597 = vrot.slane %v472, 5
        %v598 = vsel %vm587, %v595, %v597
        %v599 = vrot.slane %v473, 5
        %v600 = vsel %vm587, %v597, %v599
        %v601 = vrot.slane %v474, 5
        %v602 = vsel %vm587, %v599, %v601
        %v611 = vld [vmem:[%s2] sm:$0xff]
        %v612 = vld [vmem:[%s2 + $0x8] sm:$0xff]
        %v613 = vld [vmem:[%s2 + $0x10] sm:$0xff]
        %v614 = vld [vmem:[%s2 + $0x18] sm:$0xff]
        %v615 = vld [vmem:[%s2 + $0x20] sm:$0xff]
        %v616 = vld [vmem:[%s2 + $0x28] sm:$0xff]
        %v617 = vld [vmem:[%s2 + $0x30] sm:$0xff]
        %v618 = vld [vmem:[%s2 + $0x38] sm:$0xff]
        %v619 = vld [vmem:[%s2 + $0x40] sm:$0xff]
        %v620 = vld [vmem:[%s2 + $0x48] sm:$0xff]
        %v621 = vld [vmem:[%s2 + $0x50] sm:$0xff]
        %v622 = vld [vmem:[%s2 + $0x58] sm:$0xff]
        %v623 = vld [vmem:[%s2 + $0x60] sm:$0xff]
        %v624 = vld [vmem:[%s2 + $0x68] sm:$0xff]
        %v625 = vld [vmem:[%s2 + $0x70] sm:$0xff]
        %v626 = vld [vmem:[%s2 + $0x78] sm:$0xff]
        %v627 = vld [vmem:[%s2 + $0x80] sm:$0xff]
        %v628 = vld [vmem:[%s2 + $0x88] sm:$0xff]
        %v629 = vld [vmem:[%s2 + $0x90] sm:$0xff]
        %v630 = vld [vmem:[%s2 + $0x98] sm:$0xff]
        %v631 = vld [vmem:[%s2 + $0xa0] sm:$0xff]
        %v632 = vld [vmem:[%s2 + $0xa8] sm:$0xff]
        %v633 = vld [vmem:[%s2 + $0xb0] sm:$0xff]
        %v634 = vld [vmem:[%s2 + $0xb8] sm:$0xff]
        %v635 = vld [vmem:[%s2 + $0xc0] sm:$0xff]
        %v636 = vld [vmem:[%s2 + $0xc8] sm:$0xff]
        %v637 = vld [vmem:[%s2 + $0xd0] sm:$0xff]
        %v638 = vld [vmem:[%s2 + $0xd8] sm:$0xff]
        %v639 = vld [vmem:[%s2 + $0xe0] sm:$0xff]
        %v640 = vld [vmem:[%s2 + $0xe8] sm:$0xff]
        %v641 = vld [vmem:[%s2 + $0xf0] sm:$0xff]
        %v642 = vld [vmem:[%s2 + $0xf8] sm:$0xff]
        %v643 = vld [vmem:[%s2 + $0x100] sm:$0xff]
        %v644 = vld [vmem:[%s2 + $0x108] sm:$0xff]
        %v645 = vld [vmem:[%s2 + $0x110] sm:$0xff]
        %v646 = vld [vmem:[%s2 + $0x118] sm:$0xff]
        %v647 = vld [vmem:[%s2 + $0x120] sm:$0xff]
        %v648 = vld [vmem:[%s2 + $0x128] sm:$0xff]
        %v649 = vld [vmem:[%s2 + $0x130] sm:$0xff]
        %v650 = vld [vmem:[%s2 + $0x138] sm:$0xff]
        %v651 = vld [vmem:[%s2 + $0x140] sm:$0xff]
        %v652 = vld [vmem:[%s2 + $0x148] sm:$0xff]
        %v653 = vld [vmem:[%s2 + $0x150] sm:$0xff]
        %v654 = vld [vmem:[%s2 + $0x158] sm:$0xff]
        %v655 = vld [vmem:[%s2 + $0x160] sm:$0xff]
        %v656 = vld [vmem:[%s2 + $0x168] sm:$0xff]
        %v657 = vld [vmem:[%s2 + $0x170] sm:$0xff]
        %v658 = vld [vmem:[%s2 + $0x178] sm:$0xff]
        %v659 = vld [vmem:[%s2 + $0x180] sm:$0xff]
        %v660 = vld [vmem:[%s2 + $0x188] sm:$0xff]
        %v661 = vld [vmem:[%s2 + $0x190] sm:$0xff]
        %v662 = vld [vmem:[%s2 + $0x198] sm:$0xff]
        %v663 = vld [vmem:[%s2 + $0x1a0] sm:$0xff]
        %v664 = vld [vmem:[%s2 + $0x1a8] sm:$0xff]
        %v665 = vld [vmem:[%s2 + $0x1b0] sm:$0xff]
        %v666 = vld [vmem:[%s2 + $0x1b8] sm:$0xff]
        %v667 = vld [vmem:[%s2 + $0x1c0] sm:$0xff]
        %v668 = vld [vmem:[%s2 + $0x1c8] sm:$0xff]
        %v669 = vld [vmem:[%s2 + $0x1d0] sm:$0xff]
        %v670 = vld [vmem:[%s2 + $0x1d8] sm:$0xff]
        %v671 = vld [vmem:[%s2 + $0x1e0] sm:$0xff]
        %v672 = vld [vmem:[%s2 + $0x1e8] sm:$0xff]
        %v673 = vld [vmem:[%s2 + $0x1f0] sm:$0xff]
        %v674 = vld [vmem:[%s2 + $0x1f8] sm:$0xff]
        %v675 = vld [vmem:[%s2 + $0x200] sm:$0xff]
        %v676 = vld [vmem:[%s2 + $0x208] sm:$0xff]
        %v677 = vld [vmem:[%s2 + $0x210] sm:$0xff]
        %v678 = vld [vmem:[%s2 + $0x218] sm:$0xff]
        %v679 = vld [vmem:[%s2 + $0x220] sm:$0xff]
        %v680 = vld [vmem:[%s2 + $0x228] sm:$0xff]
        %v681 = vld [vmem:[%s2 + $0x230] sm:$0xff]
        %v682 = vld [vmem:[%s2 + $0x238] sm:$0xff]
        %v683 = vld [vmem:[%s2 + $0x240] sm:$0xff]
        %v684 = vld [vmem:[%s2 + $0x248] sm:$0xff]
        %v685 = vld [vmem:[%s2 + $0x250] sm:$0xff]
        %v686 = vld [vmem:[%s2 + $0x258] sm:$0xff]
        %v687 = vld [vmem:[%s2 + $0x260] sm:$0xff]
        %v688 = vld [vmem:[%s2 + $0x268] sm:$0xff]
        %v689 = vld [vmem:[%s2 + $0x270] sm:$0xff]
        %v690 = vld [vmem:[%s2 + $0x278] sm:$0xff]
        %v691 = vld [vmem:[%s2 + $0x280] sm:$0xff]
        %v692 = vld [vmem:[%s2 + $0x288] sm:$0xff]
        %v693 = vld [vmem:[%s2 + $0x290] sm:$0xff]
        %v694 = vld [vmem:[%s2 + $0x298] sm:$0xff]
        %v695 = vld [vmem:[%s2 + $0x2a0] sm:$0xff]
        %v696 = vld [vmem:[%s2 + $0x2a8] sm:$0xff]
        %v697 = vld [vmem:[%s2 + $0x2b0] sm:$0xff]
        %v698 = vld [vmem:[%s2 + $0x2b8] sm:$0xff]
        %v699 = vld [vmem:[%s2 + $0x2c0] sm:$0xff]
        %v700 = vld [vmem:[%s2 + $0x2c8] sm:$0xff]
        %v701 = vld [vmem:[%s2 + $0x2d0] sm:$0xff]
        %v702 = vld [vmem:[%s2 + $0x2d8] sm:$0xff]
        %v703 = vld [vmem:[%s2 + $0x2e0] sm:$0xff]
        %v704 = vld [vmem:[%s2 + $0x2e8] sm:$0xff]
        %v705 = vld [vmem:[%s2 + $0x2f0] sm:$0xff]
        %v706 = vld [vmem:[%s2 + $0x2f8] sm:$0xff]
        %v707 = vld [vmem:[%s3] sm:$0x1]
        %v709 = vperm.slane %v707, 0
        %711 = vmatpush.msra.mxu0 %v626
        %712 = vmatpush.msra.mxu0 %v625
        %713 = vmatpush.msra.mxu0 %v624
        %714 = vmatpush.msra.mxu0 %v623
        %715 = vmatpush.msra.mxu0 %v622
        %716 = vmatpush.msra.mxu0 %v621
        %717 = vmatpush.msra.mxu0 %v620
        %718 = vmatpush.msra.mxu0 %v619
        %719 = vmatpush.msra.mxu0 %v618
        %720 = vmatpush.msra.mxu0 %v617
        %721 = vmatpush.msra.mxu0 %v616
        %722 = vmatpush.msra.mxu0 %v615
        %723 = vmatpush.msra.mxu0 %v614
        %724 = vmatpush.msra.mxu0 %v613
        %725 = vmatpush.msra.mxu0 %v612
        %726 = vmatpush.msra.mxu0 %v611
        %727 = vmatmul.f32.gmra.mxu0 %v467
        %v728 = vpop.f32.mrf.mxu0
        %v729 = vadd.f32 %v709, %v728
        %730 = vmatmul.f32.gmra.mxu0 %v468
        %v731 = vpop.f32.mrf.mxu0
        %v732 = vadd.f32 %v709, %v731
        %733 = vmatmul.f32.gmra.mxu0 %v469
        %v734 = vpop.f32.mrf.mxu0
        %v735 = vadd.f32 %v709, %v734
        %736 = vmatmul.f32.gmra.mxu0 %v470
        %v737 = vpop.f32.mrf.mxu0
        %v738 = vadd.f32 %v709, %v737
        %739 = vmatmul.f32.gmra.mxu0 %v471
        %v740 = vpop.f32.mrf.mxu0
        %v741 = vadd.f32 %v709, %v740
        %742 = vmatmul.f32.gmra.mxu0 %v472
        %v743 = vpop.f32.mrf.mxu0
        %v744 = vadd.f32 %v709, %v743
        %745 = vmatmul.f32.gmra.mxu0 %v473
        %v746 = vpop.f32.mrf.mxu0
        %v747 = vadd.f32 %v709, %v746
        %748 = vmatmul.f32.gmra.mxu0 %v474
        %v749 = vpop.f32.mrf.mxu0
        %v750 = vadd.f32 %v709, %v749
        %751 = vdwg.mxu0
        %752 = vmatpush.msra.mxu0 %v642
        %753 = vmatpush.msra.mxu0 %v641
        %754 = vmatpush.msra.mxu0 %v640
        %755 = vmatpush.msra.mxu0 %v639
        %756 = vmatpush.msra.mxu0 %v638
        %757 = vmatpush.msra.mxu0 %v637
        %758 = vmatpush.msra.mxu0 %v636
        %759 = vmatpush.msra.mxu0 %v635
        %760 = vmatpush.msra.mxu0 %v634
        %761 = vmatpush.msra.mxu0 %v633
        %762 = vmatpush.msra.mxu0 %v632
        %763 = vmatpush.msra.mxu0 %v631
        %764 = vmatpush.msra.mxu0 %v630
        %765 = vmatpush.msra.mxu0 %v629
        %766 = vmatpush.msra.mxu0 %v628
        %767 = vmatpush.msra.mxu0 %v627
        %768 = vmatmul.f32.gmra.mxu0 %v494
        %v769 = vpop.f32.mrf.mxu0
        %v770 = vadd.f32 %v729, %v769
        %771 = vmatmul.f32.gmra.mxu0 %v496
        %v772 = vpop.f32.mrf.mxu0
        %v773 = vadd.f32 %v732, %v772
        %774 = vmatmul.f32.gmra.mxu0 %v498
        %v775 = vpop.f32.mrf.mxu0
        %v776 = vadd.f32 %v735, %v775
        %777 = vmatmul.f32.gmra.mxu0 %v500
        %v778 = vpop.f32.mrf.mxu0
        %v779 = vadd.f32 %v738, %v778
        %780 = vmatmul.f32.gmra.mxu0 %v502
        %v781 = vpop.f32.mrf.mxu0
        %v782 = vadd.f32 %v741, %v781
        %783 = vmatmul.f32.gmra.mxu0 %v504
        %v784 = vpop.f32.mrf.mxu0
        %v785 = vadd.f32 %v744, %v784
        %786 = vmatmul.f32.gmra.mxu0 %v506
        %v787 = vpop.f32.mrf.mxu0
        %v788 = vadd.f32 %v747, %v787
        %789 = vmatmul.f32.gmra.mxu0 %v505
        %v790 = vpop.f32.mrf.mxu0
        %v791 = vadd.f32 %v750, %v790
        %792 = vdwg.mxu0
        %793 = vmatpush.msra.mxu0 %v658
        %794 = vmatpush.msra.mxu0 %v657
        %795 = vmatpush.msra.mxu0 %v656
        %796 = vmatpush.msra.mxu0 %v655
        %797 = vmatpush.msra.mxu0 %v654
        %798 = vmatpush.msra.mxu0 %v653
        %799 = vmatpush.msra.mxu0 %v652
        %800 = vmatpush.msra.mxu0 %v651
        %801 = vmatpush.msra.mxu0 %v650
        %802 = vmatpush.msra.mxu0 %v649
        %803 = vmatpush.msra.mxu0 %v648
        %804 = vmatpush.msra.mxu0 %v647
        %805 = vmatpush.msra.mxu0 %v646
        %806 = vmatpush.msra.mxu0 %v645
        %807 = vmatpush.msra.mxu0 %v644
        %808 = vmatpush.msra.mxu0 %v643
        %809 = vmatmul.f32.gmra.mxu0 %v518
        %v810 = vpop.f32.mrf.mxu0
        %v811 = vadd.f32 %v770, %v810
        %812 = vmatmul.f32.gmra.mxu0 %v520
        %v813 = vpop.f32.mrf.mxu0
        %v814 = vadd.f32 %v773, %v813
        %815 = vmatmul.f32.gmra.mxu0 %v522
        %v816 = vpop.f32.mrf.mxu0
        %v817 = vadd.f32 %v776, %v816
        %818 = vmatmul.f32.gmra.mxu0 %v524
        %v819 = vpop.f32.mrf.mxu0
        %v820 = vadd.f32 %v779, %v819
        %821 = vmatmul.f32.gmra.mxu0 %v526
        %v822 = vpop.f32.mrf.mxu0
        %v823 = vadd.f32 %v782, %v822
        %824 = vmatmul.f32.gmra.mxu0 %v528
        %v825 = vpop.f32.mrf.mxu0
        %v826 = vadd.f32 %v785, %v825
        %827 = vmatmul.f32.gmra.mxu0 %v530
        %v828 = vpop.f32.mrf.mxu0
        %v829 = vadd.f32 %v788, %v828
        %830 = vmatmul.f32.gmra.mxu0 %v529
        %v831 = vpop.f32.mrf.mxu0
        %v832 = vadd.f32 %v791, %v831
        %833 = vdwg.mxu0
        %834 = vmatpush.msra.mxu0 %v674
        %835 = vmatpush.msra.mxu0 %v673
        %836 = vmatpush.msra.mxu0 %v672
        %837 = vmatpush.msra.mxu0 %v671
        %838 = vmatpush.msra.mxu0 %v670
        %839 = vmatpush.msra.mxu0 %v669
        %840 = vmatpush.msra.mxu0 %v668
        %841 = vmatpush.msra.mxu0 %v667
        %842 = vmatpush.msra.mxu0 %v666
        %843 = vmatpush.msra.mxu0 %v665
        %844 = vmatpush.msra.mxu0 %v664
        %845 = vmatpush.msra.mxu0 %v663
        %846 = vmatpush.msra.mxu0 %v662
        %847 = vmatpush.msra.mxu0 %v661
        %848 = vmatpush.msra.mxu0 %v660
        %849 = vmatpush.msra.mxu0 %v659
        %850 = vmatmul.f32.gmra.mxu0 %v542
        %v851 = vpop.f32.mrf.mxu0
        %v852 = vadd.f32 %v811, %v851
        %853 = vmatmul.f32.gmra.mxu0 %v544
        %v854 = vpop.f32.mrf.mxu0
        %v855 = vadd.f32 %v814, %v854
        %856 = vmatmul.f32.gmra.mxu0 %v546
        %v857 = vpop.f32.mrf.mxu0
        %v858 = vadd.f32 %v817, %v857
        %859 = vmatmul.f32.gmra.mxu0 %v548
        %v860 = vpop.f32.mrf.mxu0
        %v861 = vadd.f32 %v820, %v860
        %862 = vmatmul.f32.gmra.mxu0 %v550
        %v863 = vpop.f32.mrf.mxu0
        %v864 = vadd.f32 %v823, %v863
        %865 = vmatmul.f32.gmra.mxu0 %v552
        %v866 = vpop.f32.mrf.mxu0
        %v867 = vadd.f32 %v826, %v866
        %868 = vmatmul.f32.gmra.mxu0 %v554
        %v869 = vpop.f32.mrf.mxu0
        %v870 = vadd.f32 %v829, %v869
        %871 = vmatmul.f32.gmra.mxu0 %v553
        %v872 = vpop.f32.mrf.mxu0
        %v873 = vadd.f32 %v832, %v872
        %874 = vdwg.mxu0
        %875 = vmatpush.msra.mxu0 %v690
        %876 = vmatpush.msra.mxu0 %v689
        %877 = vmatpush.msra.mxu0 %v688
        %878 = vmatpush.msra.mxu0 %v687
        %879 = vmatpush.msra.mxu0 %v686
        %880 = vmatpush.msra.mxu0 %v685
        %881 = vmatpush.msra.mxu0 %v684
        %882 = vmatpush.msra.mxu0 %v683
        %883 = vmatpush.msra.mxu0 %v682
        %884 = vmatpush.msra.mxu0 %v681
        %885 = vmatpush.msra.mxu0 %v680
        %886 = vmatpush.msra.mxu0 %v679
        %887 = vmatpush.msra.mxu0 %v678
        %888 = vmatpush.msra.mxu0 %v677
        %889 = vmatpush.msra.mxu0 %v676
        %890 = vmatpush.msra.mxu0 %v675
        %891 = vmatmul.f32.gmra.mxu0 %v566
        %v892 = vpop.f32.mrf.mxu0
        %v893 = vadd.f32 %v852, %v892
        %894 = vmatmul.f32.gmra.mxu0 %v568
        %v895 = vpop.f32.mrf.mxu0
        %v896 = vadd.f32 %v855, %v895
        %897 = vmatmul.f32.gmra.mxu0 %v570
        %v898 = vpop.f32.mrf.mxu0
        %v899 = vadd.f32 %v858, %v898
        %900 = vmatmul.f32.gmra.mxu0 %v572
        %v901 = vpop.f32.mrf.mxu0
        %v902 = vadd.f32 %v861, %v901
        %903 = vmatmul.f32.gmra.mxu0 %v574
        %v904 = vpop.f32.mrf.mxu0
        %v905 = vadd.f32 %v864, %v904
        %906 = vmatmul.f32.gmra.mxu0 %v576
        %v907 = vpop.f32.mrf.mxu0
        %v908 = vadd.f32 %v867, %v907
        %909 = vmatmul.f32.gmra.mxu0 %v578
        %v910 = vpop.f32.mrf.mxu0
        %v911 = vadd.f32 %v870, %v910
        %912 = vmatmul.f32.gmra.mxu0 %v577
        %v913 = vpop.f32.mrf.mxu0
        %v914 = vadd.f32 %v873, %v913
        %915 = vdwg.mxu0
        %916 = vmatpush.msra.mxu0 %v706
        %917 = vmatpush.msra.mxu0 %v705
        %918 = vmatpush.msra.mxu0 %v704
        %919 = vmatpush.msra.mxu0 %v703
        %920 = vmatpush.msra.mxu0 %v702
        %921 = vmatpush.msra.mxu0 %v701
        %922 = vmatpush.msra.mxu0 %v700
        %923 = vmatpush.msra.mxu0 %v699
        %924 = vmatpush.msra.mxu0 %v698
        %925 = vmatpush.msra.mxu0 %v697
        %926 = vmatpush.msra.mxu0 %v696
        %927 = vmatpush.msra.mxu0 %v695
        %928 = vmatpush.msra.mxu0 %v694
        %929 = vmatpush.msra.mxu0 %v693
        %930 = vmatpush.msra.mxu0 %v692
        %931 = vmatpush.msra.mxu0 %v691
        %932 = vmatmul.f32.gmra.mxu0 %v590
        %v933 = vpop.f32.mrf.mxu0
        %v934 = vadd.f32 %v893, %v933
        %935 = vmatmul.f32.gmra.mxu0 %v592
        %v936 = vpop.f32.mrf.mxu0
        %v937 = vadd.f32 %v896, %v936
        %938 = vmatmul.f32.gmra.mxu0 %v594
        %v939 = vpop.f32.mrf.mxu0
        %v940 = vadd.f32 %v899, %v939
        %941 = vmatmul.f32.gmra.mxu0 %v596
        %v942 = vpop.f32.mrf.mxu0
        %v943 = vadd.f32 %v902, %v942
        %944 = vmatmul.f32.gmra.mxu0 %v598
        %v945 = vpop.f32.mrf.mxu0
        %v946 = vadd.f32 %v905, %v945
        %947 = vmatmul.f32.gmra.mxu0 %v600
        %v948 = vpop.f32.mrf.mxu0
        %v949 = vadd.f32 %v908, %v948
        %950 = vmatmul.f32.gmra.mxu0 %v602
        %v951 = vpop.f32.mrf.mxu0
        %v952 = vadd.f32 %v911, %v951
        %953 = vmatmul.f32.gmra.mxu0 %v601
        %v954 = vpop.f32.mrf.mxu0
        %v955 = vadd.f32 %v914, %v954
        %956 = vdwg.mxu0
        %v957 = vmax.f32 %v934, 0.0
        %v958 = vmax.f32 %v937, 0.0
        %v959 = vmax.f32 %v940, 0.0
        %v960 = vmax.f32 %v943, 0.0
        %v961 = vmax.f32 %v946, 0.0
        %v962 = vmax.f32 %v949, 0.0
        %v963 = vmax.f32 %v952, 0.0
        %v964 = vmax.f32 %v955, 0.0
        %v972 = vrot.slane %v957, 1
        %v973 = vrot.slane %v958, 1
        %v974 = vsel %vm491, %v972, %v973
        %v975 = vrot.slane %v959, 1
        %v976 = vsel %vm491, %v973, %v975
        %v977 = vrot.slane %v960, 1
        %v978 = vsel %vm491, %v975, %v977
        %v979 = vrot.slane %v961, 1
        %v980 = vsel %vm491, %v977, %v979
        %v981 = vrot.slane %v962, 1
        %v982 = vsel %vm491, %v979, %v981
        %v983 = vrot.slane %v963, 1
        %v984 = vsel %vm491, %v981, %v983
        %985 = vrot.lane.b32.xlu0 %v974, 32
        %v986 = vpop.permute.xlu0 %985
        %987 = vrot.lane.b32.xlu0 %v976, 32
        %v988 = vpop.permute.xlu0 %987
        %989 = vrot.lane.b32.xlu0 %v978, 32
        %v990 = vpop.permute.xlu0 %989
        %991 = vrot.lane.b32.xlu0 %v980, 32
        %v992 = vpop.permute.xlu0 %991
        %993 = vrot.lane.b32.xlu0 %v982, 32
        %v994 = vpop.permute.xlu0 %993
        %995 = vrot.lane.b32.xlu0 %v984, 32
        %v996 = vpop.permute.xlu0 %995
        %997 = vrot.lane.b32.xlu0 %v983, 32
        %v998 = vpop.permute.xlu0 %997
        %v1006 = vrot.slane %v957, 2
        %v1007 = vrot.slane %v958, 2
        %v1008 = vsel %vm515, %v1006, %v1007
        %v1009 = vrot.slane %v959, 2
        %v1010 = vsel %vm515, %v1007, %v1009
        %v1011 = vrot.slane %v960, 2
        %v1012 = vsel %vm515, %v1009, %v1011
        %v1013 = vrot.slane %v961, 2
        %v1014 = vsel %vm515, %v1011, %v1013
        %v1015 = vrot.slane %v962, 2
        %v1016 = vsel %vm515, %v1013, %v1015
        %v1017 = vrot.slane %v963, 2
        %v1018 = vsel %vm515, %v1015, %v1017
        %1019 = vrot.lane.b32.xlu0 %v1008, 64
        %v1020 = vpop.permute.xlu0 %1019
        %1021 = vrot.lane.b32.xlu0 %v1010, 64
        %v1022 = vpop.permute.xlu0 %1021
        %1023 = vrot.lane.b32.xlu0 %v1012, 64
        %v1024 = vpop.permute.xlu0 %1023
        %1025 = vrot.lane.b32.xlu0 %v1014, 64
        %v1026 = vpop.permute.xlu0 %1025
        %1027 = vrot.lane.b32.xlu0 %v1016, 64
        %v1028 = vpop.permute.xlu0 %1027
        %1029 = vrot.lane.b32.xlu0 %v1018, 64
        %v1030 = vpop.permute.xlu0 %1029
        %1031 = vrot.lane.b32.xlu0 %v1017, 64
        %v1032 = vpop.permute.xlu0 %1031
        %v1041 = vrot.slane %v957, 3
        %v1042 = vrot.slane %v958, 3
        %v1043 = vsel %vm539, %v1041, %v1042
        %v1044 = vrot.slane %v959, 3
        %v1045 = vsel %vm539, %v1042, %v1044
        %v1046 = vrot.slane %v960, 3
        %v1047 = vsel %vm539, %v1044, %v1046
        %v1048 = vrot.slane %v961, 3
        %v1049 = vsel %vm539, %v1046, %v1048
        %v1050 = vrot.slane %v962, 3
        %v1051 = vsel %vm539, %v1048, %v1050
        %v1052 = vrot.slane %v963, 3
        %v1053 = vsel %vm539, %v1050, %v1052
        %v1054 = vrot.slane %v964, 3
        %v1055 = vsel %vm539, %v1052, %v1054
        %1056 = vrot.lane.b32.xlu0 %v1043, 96
        %v1057 = vpop.permute.xlu0 %1056
        %1058 = vrot.lane.b32.xlu0 %v1045, 96
        %v1059 = vpop.permute.xlu0 %1058
        %1060 = vrot.lane.b32.xlu0 %v1047, 96
        %v1061 = vpop.permute.xlu0 %1060
        %1062 = vrot.lane.b32.xlu0 %v1049, 96
        %v1063 = vpop.permute.xlu0 %1062
        %1064 = vrot.lane.b32.xlu0 %v1051, 96
        %v1065 = vpop.permute.xlu0 %1064
        %1066 = vrot.lane.b32.xlu0 %v1053, 96
        %v1067 = vpop.permute.xlu0 %1066
        %1068 = vrot.lane.b32.xlu0 %v1055, 96
        %v1069 = vpop.permute.xlu0 %1068
        %v1077 = vrot.slane %v957, 4
        %v1078 = vrot.slane %v958, 4
        %v1079 = vsel %vm563, %v1077, %v1078
        %v1080 = vrot.slane %v959, 4
        %v1081 = vsel %vm563, %v1078, %v1080
        %v1082 = vrot.slane %v960, 4
        %v1083 = vsel %vm563, %v1080, %v1082
        %v1084 = vrot.slane %v961, 4
        %v1085 = vsel %vm563, %v1082, %v1084
        %v1086 = vrot.slane %v962, 4
        %v1087 = vsel %vm563, %v1084, %v1086
        %v1088 = vrot.slane %v963, 4
        %v1089 = vsel %vm563, %v1086, %v1088
        %v1090 = vrot.slane %v964, 4
        %v1091 = vsel %vm563, %v1088, %v1090
        %v1099 = vrot.slane %v957, 5
        %v1100 = vrot.slane %v958, 5
        %v1101 = vsel %vm587, %v1099, %v1100
        %v1102 = vrot.slane %v959, 5
        %v1103 = vsel %vm587, %v1100, %v1102
        %v1104 = vrot.slane %v960, 5
        %v1105 = vsel %vm587, %v1102, %v1104
        %v1106 = vrot.slane %v961, 5
        %v1107 = vsel %vm587, %v1104, %v1106
        %v1108 = vrot.slane %v962, 5
        %v1109 = vsel %vm587, %v1106, %v1108
        %v1110 = vrot.slane %v963, 5
        %v1111 = vsel %vm587, %v1108, %v1110
        %v1112 = vrot.slane %v964, 5
        %v1113 = vsel %vm587, %v1110, %v1112
        %1114 = vrot.lane.b32.xlu0 %v1101, 32
        %v1115 = vpop.permute.xlu0 %1114
        %1116 = vrot.lane.b32.xlu0 %v1103, 32
        %v1117 = vpop.permute.xlu0 %1116
        %1118 = vrot.lane.b32.xlu0 %v1105, 32
        %v1119 = vpop.permute.xlu0 %1118
        %1120 = vrot.lane.b32.xlu0 %v1107, 32
        %v1121 = vpop.permute.xlu0 %1120
        %1122 = vrot.lane.b32.xlu0 %v1109, 32
        %v1123 = vpop.permute.xlu0 %1122
        %1124 = vrot.lane.b32.xlu0 %v1111, 32
        %v1125 = vpop.permute.xlu0 %1124
        %1126 = vrot.lane.b32.xlu0 %v1113, 32
        %v1127 = vpop.permute.xlu0 %1126
        %vm1135 = vcmask 261120
        %v1136 = vsel %vm1135, %v957, %v986
        %v1137 = vsel %vm1135, %v958, %v988
        %v1138 = vsel %vm1135, %v959, %v990
        %v1139 = vsel %vm1135, %v960, %v992
        %v1140 = vsel %vm1135, %v961, %v994
        %v1141 = vsel %vm1135, %v962, %v996
        %v1142 = vsel %vm1135, %v963, %v998
        %vm1143 = vcmask 523264
        %v1144 = vsel %vm1143, %v1136, %v1020
        %v1145 = vsel %vm1143, %v1137, %v1022
        %v1146 = vsel %vm1143, %v1138, %v1024
        %v1147 = vsel %vm1143, %v1139, %v1026
        %v1148 = vsel %vm1143, %v1140, %v1028
        %v1149 = vsel %vm1143, %v1141, %v1030
        %v1150 = vsel %vm1143, %v1142, %v1032
        %vm1151 = vcmask 785408
        %v1152 = vsel %vm1151, %v1144, %v1057
        %v1153 = vsel %vm1151, %v1145, %v1059
        %v1154 = vsel %vm1151, %v1146, %v1061
        %v1155 = vsel %vm1151, %v1147, %v1063
        %v1156 = vsel %vm1151, %v1148, %v1065
        %v1157 = vsel %vm1151, %v1149, %v1067
        %v1158 = vsel %vm1151, %v1150, %v1069
        %v1159 = vsel %vm1135, %v1079, %v1115
        %v1160 = vsel %vm1135, %v1081, %v1117
        %v1161 = vsel %vm1135, %v1083, %v1119
        %v1162 = vsel %vm1135, %v1085, %v1121
        %v1163 = vsel %vm1135, %v1087, %v1123
        %v1164 = vsel %vm1135, %v1089, %v1125
        %v1165 = vsel %vm1135, %v1091, %v1127
        %v1166 = vld [vmem:[%s4] sm:$0xff]
        %v1167 = vld [vmem:[%s4 + $0x8] sm:$0xff]
        %v1168 = vld [vmem:[%s4 + $0x10] sm:$0xff]
        %v1169 = vld [vmem:[%s4 + $0x18] sm:$0xff]
        %v1170 = vld [vmem:[%s4 + $0x20] sm:$0xff]
        %v1171 = vld [vmem:[%s4 + $0x28] sm:$0xff]
        %v1172 = vld [vmem:[%s4 + $0x30] sm:$0xff]
        %v1173 = vld [vmem:[%s4 + $0x38] sm:$0xff]
        %v1174 = vld [vmem:[%s4 + $0x40] sm:$0xff]
        %v1175 = vld [vmem:[%s4 + $0x48] sm:$0xff]
        %v1176 = vld [vmem:[%s4 + $0x50] sm:$0xff]
        %v1177 = vld [vmem:[%s4 + $0x58] sm:$0xff]
        %v1178 = vld [vmem:[%s4 + $0x60] sm:$0xff]
        %v1179 = vld [vmem:[%s4 + $0x68] sm:$0xff]
        %v1180 = vld [vmem:[%s4 + $0x70] sm:$0xff]
        %v1181 = vld [vmem:[%s4 + $0x78] sm:$0xff]
        %v1182 = vld [vmem:[%s4 + $0x80] sm:$0xff]
        %v1183 = vld [vmem:[%s4 + $0x88] sm:$0xff]
        %v1184 = vld [vmem:[%s4 + $0x90] sm:$0xff]
        %v1185 = vld [vmem:[%s4 + $0x98] sm:$0xff]
        %v1186 = vld [vmem:[%s4 + $0xa0] sm:$0xff]
        %v1187 = vld [vmem:[%s4 + $0xa8] sm:$0xff]
        %v1188 = vld [vmem:[%s4 + $0xb0] sm:$0xff]
        %v1189 = vld [vmem:[%s4 + $0xb8] sm:$0xff]
        %v1190 = vld [vmem:[%s5] sm:$0x1]
        %v1192 = vperm.slane %v1190, 0
        %v1195 = vsel %vm1143, %v1159, 0
        %v1198 = vsel %vm1143, %v1160, 0
        %v1201 = vsel %vm1143, %v1161, 0
        %v1204 = vsel %vm1143, %v1162, 0
        %v1207 = vsel %vm1143, %v1163, 0
        %v1210 = vsel %vm1143, %v1164, 0
        %v1213 = vsel %vm1143, %v1165, 0
        %1215 = vmatpush.msra.mxu0 %v1181
        %1216 = vmatpush.msra.mxu0 %v1180
        %1217 = vmatpush.msra.mxu0 %v1179
        %1218 = vmatpush.msra.mxu0 %v1178
        %1219 = vmatpush.msra.mxu0 %v1177
        %1220 = vmatpush.msra.mxu0 %v1176
        %1221 = vmatpush.msra.mxu0 %v1175
        %1222 = vmatpush.msra.mxu0 %v1174
        %1223 = vmatpush.msra.mxu0 %v1173
        %1224 = vmatpush.msra.mxu0 %v1172
        %1225 = vmatpush.msra.mxu0 %v1171
        %1226 = vmatpush.msra.mxu0 %v1170
        %1227 = vmatpush.msra.mxu0 %v1169
        %1228 = vmatpush.msra.mxu0 %v1168
        %1229 = vmatpush.msra.mxu0 %v1167
        %1230 = vmatpush.msra.mxu0 %v1166
        %1231 = vmatmul.f32.gmra.mxu0 %v1152
        %v1232 = vpop.f32.mrf.mxu0
        %v1233 = vadd.f32 %v1192, %v1232
        %1234 = vmatmul.f32.gmra.mxu0 %v1153
        %v1235 = vpop.f32.mrf.mxu0
        %v1236 = vadd.f32 %v1192, %v1235
        %1237 = vmatmul.f32.gmra.mxu0 %v1154
        %v1238 = vpop.f32.mrf.mxu0
        %v1239 = vadd.f32 %v1192, %v1238
        %1240 = vmatmul.f32.gmra.mxu0 %v1155
        %v1241 = vpop.f32.mrf.mxu0
        %v1242 = vadd.f32 %v1192, %v1241
        %1243 = vmatmul.f32.gmra.mxu0 %v1156
        %v1244 = vpop.f32.mrf.mxu0
        %v1245 = vadd.f32 %v1192, %v1244
        %1246 = vmatmul.f32.gmra.mxu0 %v1157
        %v1247 = vpop.f32.mrf.mxu0
        %v1248 = vadd.f32 %v1192, %v1247
        %1249 = vmatmul.f32.gmra.mxu0 %v1158
        %v1250 = vpop.f32.mrf.mxu0
        %v1251 = vadd.f32 %v1192, %v1250
        %1252 = vdwg.mxu0
        %1253 = vmatpush.msra.mxu0 0.0
        %1254 = vmatpush.msra.mxu0 0.0
        %1255 = vmatpush.msra.mxu0 0.0
        %1256 = vmatpush.msra.mxu0 0.0
        %1257 = vmatpush.msra.mxu0 0.0
        %1258 = vmatpush.msra.mxu0 0.0
        %1259 = vmatpush.msra.mxu0 0.0
        %1260 = vmatpush.msra.mxu0 0.0
        %1261 = vmatpush.msra.mxu0 %v1189
        %1262 = vmatpush.msra.mxu0 %v1188
        %1263 = vmatpush.msra.mxu0 %v1187
        %1264 = vmatpush.msra.mxu0 %v1186
        %1265 = vmatpush.msra.mxu0 %v1185
        %1266 = vmatpush.msra.mxu0 %v1184
        %1267 = vmatpush.msra.mxu0 %v1183
        %1268 = vmatpush.msra.mxu0 %v1182
        %1269 = vmatmul.f32.gmra.mxu0 %v1195
        %v1270 = vpop.f32.mrf.mxu0
        %v1271 = vadd.f32 %v1233, %v1270
        %1272 = vmatmul.f32.gmra.mxu0 %v1198
        %v1273 = vpop.f32.mrf.mxu0
        %v1274 = vadd.f32 %v1236, %v1273
        %1275 = vmatmul.f32.gmra.mxu0 %v1201
        %v1276 = vpop.f32.mrf.mxu0
        %v1277 = vadd.f32 %v1239, %v1276
        %1278 = vmatmul.f32.gmra.mxu0 %v1204
        %v1279 = vpop.f32.mrf.mxu0
        %v1280 = vadd.f32 %v1242, %v1279
        %1281 = vmatmul.f32.gmra.mxu0 %v1207
        %v1282 = vpop.f32.mrf.mxu0
        %v1283 = vadd.f32 %v1245, %v1282
        %1284 = vmatmul.f32.gmra.mxu0 %v1210
        %v1285 = vpop.f32.mrf.mxu0
        %v1286 = vadd.f32 %v1248, %v1285
        %1287 = vmatmul.f32.gmra.mxu0 %v1213
        %v1288 = vpop.f32.mrf.mxu0
        %v1289 = vadd.f32 %v1251, %v1288
        %1290 = vdwg.mxu0
        %v1291 = vmax.f32 %v1271, 0.0
        %v1292 = vmax.f32 %v1274, 0.0
        %v1293 = vmax.f32 %v1277, 0.0
        %v1294 = vmax.f32 %v1280, 0.0
        %v1295 = vmax.f32 %v1283, 0.0
        %v1296 = vmax.f32 %v1286, 0.0
        %v1297 = vmax.f32 %v1289, 0.0
        %v1305 = vrot.slane %v1291, 1
        %v1306 = vrot.slane %v1292, 1
        %v1307 = vsel %vm491, %v1305, %v1306
        %v1308 = vrot.slane %v1293, 1
        %v1309 = vsel %vm491, %v1306, %v1308
        %v1310 = vrot.slane %v1294, 1
        %v1311 = vsel %vm491, %v1308, %v1310
        %v1312 = vrot.slane %v1295, 1
        %v1313 = vsel %vm491, %v1310, %v1312
        %v1314 = vrot.slane %v1296, 1
        %v1315 = vsel %vm491, %v1312, %v1314
        %v1316 = vrot.slane %v1297, 1
        %v1317 = vsel %vm491, %v1314, %v1316
        %1318 = vrot.lane.b32.xlu0 %v1307, 64
        %v1319 = vpop.permute.xlu0 %1318
        %1320 = vrot.lane.b32.xlu0 %v1309, 64
        %v1321 = vpop.permute.xlu0 %1320
        %1322 = vrot.lane.b32.xlu0 %v1311, 64
        %v1323 = vpop.permute.xlu0 %1322
        %1324 = vrot.lane.b32.xlu0 %v1313, 64
        %v1325 = vpop.permute.xlu0 %1324
        %1326 = vrot.lane.b32.xlu0 %v1315, 64
        %v1327 = vpop.permute.xlu0 %1326
        %1328 = vrot.lane.b32.xlu0 %v1317, 64
        %v1329 = vpop.permute.xlu0 %1328
        %1330 = vrot.lane.b32.xlu0 %v1316, 64
        %v1331 = vpop.permute.xlu0 %1330
        %v1339 = vrot.slane %v1291, 2
        %v1340 = vrot.slane %v1292, 2
        %v1341 = vsel %vm515, %v1339, %v1340
        %v1342 = vrot.slane %v1293, 2
        %v1343 = vsel %vm515, %v1340, %v1342
        %v1344 = vrot.slane %v1294, 2
        %v1345 = vsel %vm515, %v1342, %v1344
        %v1346 = vrot.slane %v1295, 2
        %v1347 = vsel %vm515, %v1344, %v1346
        %v1348 = vrot.slane %v1296, 2
        %v1349 = vsel %vm515, %v1346, %v1348
        %v1350 = vrot.slane %v1297, 2
        %v1351 = vsel %vm515, %v1348, %v1350
        %v1359 = vrot.slane %v1291, 3
        %v1360 = vrot.slane %v1292, 3
        %v1361 = vsel %vm539, %v1359, %v1360
        %v1362 = vrot.slane %v1293, 3
        %v1363 = vsel %vm539, %v1360, %v1362
        %v1364 = vrot.slane %v1294, 3
        %v1365 = vsel %vm539, %v1362, %v1364
        %v1366 = vrot.slane %v1295, 3
        %v1367 = vsel %vm539, %v1364, %v1366
        %v1368 = vrot.slane %v1296, 3
        %v1369 = vsel %vm539, %v1366, %v1368
        %v1370 = vrot.slane %v1297, 3
        %v1371 = vsel %vm539, %v1368, %v1370
        %1372 = vrot.lane.b32.xlu0 %v1361, 64
        %v1373 = vpop.permute.xlu0 %1372
        %1374 = vrot.lane.b32.xlu0 %v1363, 64
        %v1375 = vpop.permute.xlu0 %1374
        %1376 = vrot.lane.b32.xlu0 %v1365, 64
        %v1377 = vpop.permute.xlu0 %1376
        %1378 = vrot.lane.b32.xlu0 %v1367, 64
        %v1379 = vpop.permute.xlu0 %1378
        %1380 = vrot.lane.b32.xlu0 %v1369, 64
        %v1381 = vpop.permute.xlu0 %1380
        %1382 = vrot.lane.b32.xlu0 %v1371, 64
        %v1383 = vpop.permute.xlu0 %1382
        %1384 = vrot.lane.b32.xlu0 %v1370, 64
        %v1385 = vpop.permute.xlu0 %1384
        %v1393 = vrot.slane %v1291, 4
        %v1394 = vrot.slane %v1292, 4
        %v1395 = vsel %vm563, %v1393, %v1394
        %v1396 = vrot.slane %v1293, 4
        %v1397 = vsel %vm563, %v1394, %v1396
        %v1398 = vrot.slane %v1294, 4
        %v1399 = vsel %vm563, %v1396, %v1398
        %v1400 = vrot.slane %v1295, 4
        %v1401 = vsel %vm563, %v1398, %v1400
        %v1402 = vrot.slane %v1296, 4
        %v1403 = vsel %vm563, %v1400, %v1402
        %v1404 = vrot.slane %v1297, 4
        %v1405 = vsel %vm563, %v1402, %v1404
        %v1413 = vrot.slane %v1291, 5
        %v1414 = vrot.slane %v1292, 5
        %v1415 = vsel %vm587, %v1413, %v1414
        %v1416 = vrot.slane %v1293, 5
        %v1417 = vsel %vm587, %v1414, %v1416
        %v1418 = vrot.slane %v1294, 5
        %v1419 = vsel %vm587, %v1416, %v1418
        %v1420 = vrot.slane %v1295, 5
        %v1421 = vsel %vm587, %v1418, %v1420
        %v1422 = vrot.slane %v1296, 5
        %v1423 = vsel %vm587, %v1420, %v1422
        %v1424 = vrot.slane %v1297, 5
        %v1425 = vsel %vm587, %v1422, %v1424
        %1426 = vrot.lane.b32.xlu0 %v1415, 64
        %v1427 = vpop.permute.xlu0 %1426
        %1428 = vrot.lane.b32.xlu0 %v1417, 64
        %v1429 = vpop.permute.xlu0 %1428
        %1430 = vrot.lane.b32.xlu0 %v1419, 64
        %v1431 = vpop.permute.xlu0 %1430
        %1432 = vrot.lane.b32.xlu0 %v1421, 64
        %v1433 = vpop.permute.xlu0 %1432
        %1434 = vrot.lane.b32.xlu0 %v1423, 64
        %v1435 = vpop.permute.xlu0 %1434
        %1436 = vrot.lane.b32.xlu0 %v1425, 64
        %v1437 = vpop.permute.xlu0 %1436
        %1438 = vrot.lane.b32.xlu0 %v1424, 64
        %v1439 = vpop.permute.xlu0 %1438
        %v1447 = vsel %vm1143, %v1291, %v1319
        %v1448 = vsel %vm1143, %v1292, %v1321
        %v1449 = vsel %vm1143, %v1293, %v1323
        %v1450 = vsel %vm1143, %v1294, %v1325
        %v1451 = vsel %vm1143, %v1295, %v1327
        %v1452 = vsel %vm1143, %v1296, %v1329
        %v1453 = vsel %vm1143, %v1297, %v1331
        %v1454 = vsel %vm1143, %v1341, %v1373
        %v1455 = vsel %vm1143, %v1343, %v1375
        %v1456 = vsel %vm1143, %v1345, %v1377
        %v1457 = vsel %vm1143, %v1347, %v1379
        %v1458 = vsel %vm1143, %v1349, %v1381
        %v1459 = vsel %vm1143, %v1351, %v1383
        %v1460 = vsel %vm1143, %v1350, %v1385
        %v1461 = vsel %vm1143, %v1395, %v1427
        %v1462 = vsel %vm1143, %v1397, %v1429
        %v1463 = vsel %vm1143, %v1399, %v1431
        %v1464 = vsel %vm1143, %v1401, %v1433
        %v1465 = vsel %vm1143, %v1403, %v1435
        %v1466 = vsel %vm1143, %v1405, %v1437
        %v1467 = vsel %vm1143, %v1404, %v1439
        %v1468 = vld [vmem:[%s6] sm:$0xff]
        %v1469 = vld [vmem:[%s6 + $0x8] sm:$0xff]
        %v1470 = vld [vmem:[%s6 + $0x10] sm:$0xff]
        %v1471 = vld [vmem:[%s6 + $0x18] sm:$0xff]
        %v1472 = vld [vmem:[%s6 + $0x20] sm:$0xff]
        %v1473 = vld [vmem:[%s6 + $0x28] sm:$0xff]
        %v1474 = vld [vmem:[%s6 + $0x30] sm:$0xff]
        %v1475 = vld [vmem:[%s6 + $0x38] sm:$0xff]
        %v1476 = vld [vmem:[%s6 + $0x40] sm:$0xff]
        %v1477 = vld [vmem:[%s6 + $0x48] sm:$0xff]
        %v1478 = vld [vmem:[%s6 + $0x50] sm:$0xff]
        %v1479 = vld [vmem:[%s6 + $0x58] sm:$0xff]
        %v1480 = vld [vmem:[%s6 + $0x60] sm:$0xff]
        %v1481 = vld [vmem:[%s6 + $0x68] sm:$0xff]
        %v1482 = vld [vmem:[%s6 + $0x70] sm:$0xff]
        %v1483 = vld [vmem:[%s6 + $0x78] sm:$0xff]
        %v1484 = vld [vmem:[%s6 + $0x80] sm:$0xff]
        %v1485 = vld [vmem:[%s6 + $0x88] sm:$0xff]
        %v1486 = vld [vmem:[%s6 + $0x90] sm:$0xff]
        %v1487 = vld [vmem:[%s6 + $0x98] sm:$0xff]
        %v1488 = vld [vmem:[%s6 + $0xa0] sm:$0xff]
        %v1489 = vld [vmem:[%s6 + $0xa8] sm:$0xff]
        %v1490 = vld [vmem:[%s6 + $0xb0] sm:$0xff]
        %v1491 = vld [vmem:[%s6 + $0xb8] sm:$0xff]
        %v1492 = vld [vmem:[%s6 + $0xc0] sm:$0xff]
        %v1493 = vld [vmem:[%s6 + $0xc8] sm:$0xff]
        %v1494 = vld [vmem:[%s6 + $0xd0] sm:$0xff]
        %v1495 = vld [vmem:[%s6 + $0xd8] sm:$0xff]
        %v1496 = vld [vmem:[%s6 + $0xe0] sm:$0xff]
        %v1497 = vld [vmem:[%s6 + $0xe8] sm:$0xff]
        %v1498 = vld [vmem:[%s6 + $0xf0] sm:$0xff]
        %v1499 = vld [vmem:[%s6 + $0xf8] sm:$0xff]
        %v1500 = vld [vmem:[%s6 + $0x100] sm:$0xff]
        %v1501 = vld [vmem:[%s6 + $0x108] sm:$0xff]
        %v1502 = vld [vmem:[%s6 + $0x110] sm:$0xff]
        %v1503 = vld [vmem:[%s6 + $0x118] sm:$0xff]
        %v1504 = vld [vmem:[%s6 + $0x120] sm:$0xff]
        %v1505 = vld [vmem:[%s6 + $0x128] sm:$0xff]
        %v1506 = vld [vmem:[%s6 + $0x130] sm:$0xff]
        %v1507 = vld [vmem:[%s6 + $0x138] sm:$0xff]
        %v1508 = vld [vmem:[%s6 + $0x140] sm:$0xff]
        %v1509 = vld [vmem:[%s6 + $0x148] sm:$0xff]
        %v1510 = vld [vmem:[%s6 + $0x150] sm:$0xff]
        %v1511 = vld [vmem:[%s6 + $0x158] sm:$0xff]
        %v1512 = vld [vmem:[%s6 + $0x160] sm:$0xff]
        %v1513 = vld [vmem:[%s6 + $0x168] sm:$0xff]
        %v1514 = vld [vmem:[%s6 + $0x170] sm:$0xff]
        %v1515 = vld [vmem:[%s6 + $0x178] sm:$0xff]
        %v1516 = vld [vmem:[%s7] sm:$0x1]
        %v1518 = vperm.slane %v1516, 0
        %1520 = vmatpush.msra.mxu0 %v1483
        %1521 = vmatpush.msra.mxu0 %v1482
        %1522 = vmatpush.msra.mxu0 %v1481
        %1523 = vmatpush.msra.mxu0 %v1480
        %1524 = vmatpush.msra.mxu0 %v1479
        %1525 = vmatpush.msra.mxu0 %v1478
        %1526 = vmatpush.msra.mxu0 %v1477
        %1527 = vmatpush.msra.mxu0 %v1476
        %1528 = vmatpush.msra.mxu0 %v1475
        %1529 = vmatpush.msra.mxu0 %v1474
        %1530 = vmatpush.msra.mxu0 %v1473
        %1531 = vmatpush.msra.mxu0 %v1472
        %1532 = vmatpush.msra.mxu0 %v1471
        %1533 = vmatpush.msra.mxu0 %v1470
        %1534 = vmatpush.msra.mxu0 %v1469
        %1535 = vmatpush.msra.mxu0 %v1468
        %1536 = vmatmul.f32.gmra.mxu0 %v1447
        %v1537 = vpop.f32.mrf.mxu0
        %v1538 = vadd.f32 %v1518, %v1537
        %1539 = vmatmul.f32.gmra.mxu0 %v1448
        %v1540 = vpop.f32.mrf.mxu0
        %v1541 = vadd.f32 %v1518, %v1540
        %1542 = vmatmul.f32.gmra.mxu0 %v1449
        %v1543 = vpop.f32.mrf.mxu0
        %v1544 = vadd.f32 %v1518, %v1543
        %1545 = vmatmul.f32.gmra.mxu0 %v1450
        %v1546 = vpop.f32.mrf.mxu0
        %v1547 = vadd.f32 %v1518, %v1546
        %1548 = vmatmul.f32.gmra.mxu0 %v1451
        %v1549 = vpop.f32.mrf.mxu0
        %v1550 = vadd.f32 %v1518, %v1549
        %1551 = vmatmul.f32.gmra.mxu0 %v1452
        %v1552 = vpop.f32.mrf.mxu0
        %v1553 = vadd.f32 %v1518, %v1552
        %1554 = vmatmul.f32.gmra.mxu0 %v1453
        %v1555 = vpop.f32.mrf.mxu0
        %v1556 = vadd.f32 %v1518, %v1555
        %1557 = vdwg.mxu0
        %1558 = vmatpush.msra.mxu0 %v1499
        %1559 = vmatpush.msra.mxu0 %v1498
        %1560 = vmatpush.msra.mxu0 %v1497
        %1561 = vmatpush.msra.mxu0 %v1496
        %1562 = vmatpush.msra.mxu0 %v1495
        %1563 = vmatpush.msra.mxu0 %v1494
        %1564 = vmatpush.msra.mxu0 %v1493
        %1565 = vmatpush.msra.mxu0 %v1492
        %1566 = vmatpush.msra.mxu0 %v1491
        %1567 = vmatpush.msra.mxu0 %v1490
        %1568 = vmatpush.msra.mxu0 %v1489
        %1569 = vmatpush.msra.mxu0 %v1488
        %1570 = vmatpush.msra.mxu0 %v1487
        %1571 = vmatpush.msra.mxu0 %v1486
        %1572 = vmatpush.msra.mxu0 %v1485
        %1573 = vmatpush.msra.mxu0 %v1484
        %1574 = vmatmul.f32.gmra.mxu0 %v1454
        %v1575 = vpop.f32.mrf.mxu0
        %v1576 = vadd.f32 %v1538, %v1575
        %1577 = vmatmul.f32.gmra.mxu0 %v1455
        %v1578 = vpop.f32.mrf.mxu0
        %v1579 = vadd.f32 %v1541, %v1578
        %1580 = vmatmul.f32.gmra.mxu0 %v1456
        %v1581 = vpop.f32.mrf.mxu0
        %v1582 = vadd.f32 %v1544, %v1581
        %1583 = vmatmul.f32.gmra.mxu0 %v1457
        %v1584 = vpop.f32.mrf.mxu0
        %v1585 = vadd.f32 %v1547, %v1584
        %1586 = vmatmul.f32.gmra.mxu0 %v1458
        %v1587 = vpop.f32.mrf.mxu0
        %v1588 = vadd.f32 %v1550, %v1587
        %1589 = vmatmul.f32.gmra.mxu0 %v1459
        %v1590 = vpop.f32.mrf.mxu0
        %v1591 = vadd.f32 %v1553, %v1590
        %1592 = vmatmul.f32.gmra.mxu0 %v1460
        %v1593 = vpop.f32.mrf.mxu0
        %v1594 = vadd.f32 %v1556, %v1593
        %1595 = vdwg.mxu0
        %1596 = vmatpush.msra.mxu0 %v1515
        %1597 = vmatpush.msra.mxu0 %v1514
        %1598 = vmatpush.msra.mxu0 %v1513
        %1599 = vmatpush.msra.mxu0 %v1512
        %1600 = vmatpush.msra.mxu0 %v1511
        %1601 = vmatpush.msra.mxu0 %v1510
        %1602 = vmatpush.msra.mxu0 %v1509
        %1603 = vmatpush.msra.mxu0 %v1508
        %1604 = vmatpush.msra.mxu0 %v1507
        %1605 = vmatpush.msra.mxu0 %v1506
        %1606 = vmatpush.msra.mxu0 %v1505
        %1607 = vmatpush.msra.mxu0 %v1504
        %1608 = vmatpush.msra.mxu0 %v1503
        %1609 = vmatpush.msra.mxu0 %v1502
        %1610 = vmatpush.msra.mxu0 %v1501
        %1611 = vmatpush.msra.mxu0 %v1500
        %1612 = vmatmul.f32.gmra.mxu0 %v1461
        %v1613 = vpop.f32.mrf.mxu0
        %v1614 = vadd.f32 %v1576, %v1613
        %1615 = vmatmul.f32.gmra.mxu0 %v1462
        %v1616 = vpop.f32.mrf.mxu0
        %v1617 = vadd.f32 %v1579, %v1616
        %1618 = vmatmul.f32.gmra.mxu0 %v1463
        %v1619 = vpop.f32.mrf.mxu0
        %v1620 = vadd.f32 %v1582, %v1619
        %1621 = vmatmul.f32.gmra.mxu0 %v1464
        %v1622 = vpop.f32.mrf.mxu0
        %v1623 = vadd.f32 %v1585, %v1622
        %1624 = vmatmul.f32.gmra.mxu0 %v1465
        %v1625 = vpop.f32.mrf.mxu0
        %v1626 = vadd.f32 %v1588, %v1625
        %1627 = vmatmul.f32.gmra.mxu0 %v1466
        %v1628 = vpop.f32.mrf.mxu0
        %v1629 = vadd.f32 %v1591, %v1628
        %1630 = vmatmul.f32.gmra.mxu0 %v1467
        %v1631 = vpop.f32.mrf.mxu0
        %v1632 = vadd.f32 %v1594, %v1631
        %1633 = vdwg.mxu0
        %v1634 = vmax.f32 %v1614, 0.0
        %v1635 = vmax.f32 %v1617, 0.0
        %v1636 = vmax.f32 %v1620, 0.0
        %v1637 = vmax.f32 %v1623, 0.0
        %v1638 = vmax.f32 %v1626, 0.0
        %v1639 = vmax.f32 %v1629, 0.0
        %v1640 = vmax.f32 %v1632, 0.0
        %1641 = vst.msk [vmem:[#allocation2] sm:$0xff] %vm1151, %v1634
        %1642 = vst.msk [vmem:[#allocation2 + $0x8] sm:$0xff] %vm1151, %v1635
        %1643 = vst.msk [vmem:[#allocation2 + $0x10] sm:$0xff] %vm1151, %v1636
        %1644 = vst.msk [vmem:[#allocation2 + $0x18] sm:$0xff] %vm1151, %v1637
        %1645 = vst.msk [vmem:[#allocation2 + $0x20] sm:$0xff] %vm1151, %v1638
        %1646 = vst.msk [vmem:[#allocation2 + $0x28] sm:$0xff] %vm1151, %v1639
        %vm1647 = vcmask 778240
        %1648 = vst.msk [vmem:[#allocation2 + $0x30] sm:$0x1] %vm1647, %v1640
        %v1649 = vld [vmem:[#allocation2] ss:$2 sm:$0xff]
        %s1650 = scalar_lea.vmem [#allocation2], 16
        %v1651 = vld [vmem:[%s1650] ss:$2 sm:$0xff]
        %s1652 = scalar_lea.vmem [#allocation2], 32
        %v1653 = vld [vmem:[%s1652] ss:$2 sm:$0xff]
        %s1654 = scalar_lea.vmem [#allocation2], 1
        %v1655 = vld [vmem:[%s1654] ss:$2 sm:$0xff]
        %s1656 = scalar_lea.vmem [#allocation2], 17
        %v1657 = vld [vmem:[%s1656] ss:$2 sm:$0xff]
        %s1658 = scalar_lea.vmem [#allocation2], 33
        %v1659 = vld [vmem:[%s1658] ss:$2 sm:$0xff]
        %v1660 = vmax.f32 %v1649, %v1655
        %v1661 = vmax.f32 %v1651, %v1657
        %v1662 = vmax.f32 %v1653, %v1659
        %1663 = vst.msk [vmem:[%s294] sm:$0xff] %vm1151, %v1660
        %1664 = vst.msk [vmem:[%s294 + $0x8] sm:$0xff] %vm1151, %v1661
        %1665 = vst.msk [vmem:[%s294 + $0x10] sm:$0xff] %vm1151, %v1662
        %s1666 = sand.u32 %s203, 1
        %s1667 = scalar_lea.sflag [#allocation4], %s1666
        %s1668 = sand.u32 %s203, 1
        %s1669 = smul.addr %s1668, 24
        %s1670 = scalar_lea.vmem [#allocation3], %s1669
        // Predicated region
        $region53: #{tpu_custom_call.1} parent=51 // pred_check
          %p1671 = pneg %p213
        $region54: #{tpu_custom_call.1} parent=51 // pred_check_branch
          %1673 = sbr.rel (%p1671) target = $region56
        $region55: #{tpu_custom_call.1} parent=51 // pred_region
          %1675 = vsyncadd %s1667, 0
          %s1676 = smul.addr %s22, 3
          %s1677 = smul.addr %s1676, 8
          %s1678 = scalar_lea.hbm %s8, %s1677
          %s1679 = sshll.u32 %s1670, 4
          %s1680 = int_to_ptr.vmem [resolvable:$true] %s1679
          %s1681 = sshll.u32 %s1678, 4
          %s1682 = int_to_ptr.hbm [resolvable:$true] %s1681
          %1687 = dma.vmem_to_hbm [thread:$0]  %s1680, 384, %s1682, %s1667, 128, 128, 8
        $region56: #{tpu_custom_call.1} parent=51 // pred_fallthru
          _
      $region52: #{tpu_custom_call.1} parent=5 // pred_fallthru
        _
      %p1688 = scmp.le.s32.totalorder 2, %s17
      // Predicated region
      $region57: #{tpu_custom_call.1} parent=5 // pred_check
        %p1689 = pneg %p1688
      $region58: #{tpu_custom_call.1} parent=5 // pred_check_branch
        %1691 = sbr.rel (%p1689) target = $region60
      $region59: #{tpu_custom_call.1} parent=5 // pred_region
        %s1692 = ssub.s32 %s17, 2
        // Predicated region
        $region61: #{tpu_custom_call.1} parent=59 // pred_check
          %p1693 = pneg %p219
        $region62: #{tpu_custom_call.1} parent=59 // pred_check_branch
          %1695 = sbr.rel (%p1693) target = $region64
        $region63: #{tpu_custom_call.1} parent=59 // pred_region
          %s1696 = sand.u32 %s204, 1
          %s1697 = scalar_lea.sflag [#allocation4], %s1696
          %s1698 = sand.u32 %s204, 1
          %s1699 = smul.addr %s1698, 24
          %s1700 = scalar_lea.vmem [#allocation3], %s1699
          %1702 = dma.done %s1697, 384
        $region64: #{tpu_custom_call.1} parent=59 // pred_fallthru
          _
      $region60: #{tpu_custom_call.1} parent=5 // pred_fallthru
        _
    $region6: #{tpu_custom_call.1} parent=1 // loop_footer
      %s21 = sadd.s32 1, %s17
    $region7: #{tpu_custom_call.1} parent=1 // loop_footer_branch
      %16 = sbr.rel target = $region3
    $region8: #{tpu_custom_call.1} parent=1 // loop_exit
      _
    %1703 = vsyncpa [#allocation4], 1
    %s1704 = scalar_lea.sflag [#allocation4], 1
    %1705 = vsyncpa %s1704, 1

</llo_original>
